<compile_context>
chip_gen: v6e
topology: v6e:2x2x1
jax: 0.10.0
libtpu: 0.0.40
codegen_flags: <defaults>
</compile_context>

<pallas_src>
import functools
import math

import jax
import jax.numpy as jnp
from jax.experimental import pallas as pl
from jax.experimental.pallas import tpu as pltpu


# ----------------------------- fused Pallas kernel -----------------------------

def _conv_block_kernel(a_ref, bw1_ref, bw2_ref, vec_ref, g_ref, o_ref, *, img_h, inv_n):
    """Fused Conv3x3+bias -> BN -> ReLU -> Conv3x3+bias -> BN -> ReLU.

    Layout: activations are flat 2-D slabs (N*H, W*C); rows are (n, h), the minor (lane)
    axis is the flattened (w, c) pair, so every load/store is lane-dense.
      a_ref   : (N*H, W*Cin_pad)  f32 input activations (channel-padded to 128 lanes)
      bw*_ref : (3, W*Ci, W*Co)   bf16 banded weights, one per vertical tap dy in
                                  {-1,0,+1}; the band encodes the horizontal conv + pad
      vec_ref : (6, 1, W*Cout)    f32 [b1, gamma1, beta1, b2, gamma2, beta2], W-tiled
      g_ref   : (W*Cout, W*Cout)  f32 channel group-sum matrix (col j <-> channel j%Cout)
      o_ref   : (N*H, W*Cout)     f32 output slab (minor dim = W*Cout -> dense store)
    """
    f32 = jnp.float32
    bf16 = jnp.bfloat16
    rows = a_ref.shape[0]

    # Edge-row masks: zero the rows whose vertical neighbour falls outside its image
    # (this also kills the roll wrap-around across image boundaries / slab ends).
    h_pos = jax.lax.rem(jax.lax.broadcasted_iota(jnp.int32, (rows, 1), 0), img_h)
    top_edge = h_pos == 0
    bot_edge = h_pos == img_h - 1

    g = g_ref[...]

    def conv3x3(act, bw_ref, bias):
        # Vertical taps via XLU sublane rotation + VPU edge mask (no O(rows^2) matmuls).
        up = jnp.where(top_edge, 0.0, pltpu.roll(act, shift=1, axis=0))         # row h-1
        dn = jnp.where(bot_edge, 0.0, pltpu.roll(act, shift=rows - 1, axis=0))  # row h+1
        # Banded matmuls on the MXU: bf16 operands, f32 accumulation.
        y = jnp.dot(up.astype(bf16), bw_ref[0], preferred_element_type=f32)   # dy = -1
        y += jnp.dot(act.astype(bf16), bw_ref[1], preferred_element_type=f32)  # dy =  0
        y += jnp.dot(dn.astype(bf16), bw_ref[2], preferred_element_type=f32)   # dy = +1
        return y + bias

    def bn_relu(y, gamma_t, beta_t):
        # Training-mode BatchNorm2d: biased batch statistics over (N, H, W) per channel.
        # Reduce over rows first, then a single (1,W*Cout) x (W*Cout,W*Cout) matmul with
        # the channel-group matrix sums the W copies of each channel and broadcasts the
        # result back lane-dense.  All stats math stays f32.
        mean = jnp.dot(jnp.sum(y, axis=0, keepdims=True), g,
                       preferred_element_type=f32) * inv_n                   # (1, W*Cout)
        cent = y - mean
        var = jnp.dot(jnp.sum(cent * cent, axis=0, keepdims=True), g,
                      preferred_element_type=f32) * inv_n                    # (1, W*Cout)
        inv = jax.lax.rsqrt(var + 1e-5)                                      # EUP slot
        return jnp.maximum(cent * (inv * gamma_t) + beta_t, 0.0)

    h = conv3x3(a_ref[...], bw1_ref, vec_ref[0])
    h = bn_relu(h, vec_ref[1], vec_ref[2])
    h = conv3x3(h, bw2_ref, vec_ref[3])
    h = bn_relu(h, vec_ref[4], vec_ref[5])
    o_ref[...] = h.astype(o_ref.dtype)


# ----------------------------- wrapper-side parameter prep -----------------------------

def _banded_weights(w_hwio, width):
    """(3,3,Ci,Co) HWIO kernel -> (3, W*Ci, W*Co) banded matrices, one per vertical tap.

    bw[dy][wi*Ci + ci, wo*Co + co] = w[dy, wi-wo+1, ci, co] if |wi-wo| <= 1 else 0.
    The band implements the horizontal (W) convolution including its "SAME" zero pad.
    """
    _, _, ci, co = w_hwio.shape
    wi = jnp.arange(width)[:, None]
    wo = jnp.arange(width)[None, :]
    d = wi - wo
    valid = (jnp.abs(d) <= 1).astype(w_hwio.dtype)                   # (W, W)
    dx_idx = jnp.clip(d + 1, 0, 2)                                   # (W, W) in {0,1,2}
    bw = w_hwio[:, dx_idx]                                           # (3, W, W, Ci, Co)
    bw = bw * valid[None, :, :, None, None]
    return bw.transpose(0, 1, 3, 2, 4).reshape(3, width * ci, width * co)


def _channel_group_mat(width, c):
    """(W*C, W*C) 0/1 matrix: G[j, j'] = 1 iff columns j and j' hold the same channel."""
    j = jnp.arange(width * c)
    return ((j[:, None] % c) == (j[None, :] % c)).astype(jnp.float32)


def conv_block_forward(x_nchw, params):
    """ConvBlock forward. Input/output NCHW (PyTorch convention)."""
    n, cin, img_h, img_w = x_nchw.shape
    cout = params["b1"].shape[0]
    rows = n * img_h

    # Pad Cin so the input slab's minor dim W*Cin is a multiple of 128 lanes (dense vregs,
    # full-K MXU tiles for conv1); extra channels are zero and so are their weight rows.
    lane_mult = 128 // math.gcd(img_w, 128)
    cin_pad = -(-cin // lane_mult) * lane_mult
    wci, wco = img_w * cin_pad, img_w * cout

    # Parameter preprocessing (would be cached at model-load time in practice).
    w1_hwio = jnp.transpose(params["w1_oihw"], (2, 3, 1, 0))
    w1_hwio = jnp.pad(w1_hwio, ((0, 0), (0, 0), (0, cin_pad - cin), (0, 0)))
    w2_hwio = jnp.transpose(params["w2_oihw"], (2, 3, 1, 0))
    bw1 = _banded_weights(w1_hwio, img_w).astype(jnp.bfloat16)   # (3, W*Cin_pad, W*Cout)
    bw2 = _banded_weights(w2_hwio, img_w).astype(jnp.bfloat16)   # (3, W*Cout,    W*Cout)
    gmat = _channel_group_mat(img_w, cout)                       # (W*Cout, W*Cout) f32
    tile = lambda v: jnp.tile(v, img_w).reshape(1, wco)
    vec = jnp.stack([tile(params["b1"]), tile(params["gamma1"]), tile(params["beta1"]),
                     tile(params["b2"]), tile(params["gamma2"]), tile(params["beta2"])])

    # NCHW -> lane-dense (N*H, W*Cin_pad) slab (NHWC flatten; pad channels with zeros).
    x_nhwc = jnp.transpose(x_nchw, (0, 2, 3, 1))
    if cin_pad != cin:
        x_nhwc = jnp.pad(x_nhwc, ((0, 0), (0, 0), (0, 0), (0, cin_pad - cin)))
    x2d = x_nhwc.reshape(rows, wci)

    kernel = functools.partial(_conv_block_kernel, img_h=img_h,
                               inv_n=1.0 / float(n * img_h * img_w))
    out2d = pl.pallas_call(
        kernel,
        out_shape=jax.ShapeDtypeStruct((rows, wco), jnp.float32),
        grid=(1,),
        in_specs=[
            pl.BlockSpec((rows, wci), lambda i: (0, 0)),
            pl.BlockSpec((3, wci, wco), lambda i: (0, 0, 0)),
            pl.BlockSpec((3, wco, wco), lambda i: (0, 0, 0)),
            pl.BlockSpec((6, 1, wco), lambda i: (0, 0, 0)),
            pl.BlockSpec((wco, wco), lambda i: (0, 0)),
        ],
        out_specs=pl.BlockSpec((rows, wco), lambda i: (0, 0)),
        compiler_params=pltpu.CompilerParams(dimension_semantics=("arbitrary",)),
    )(x2d, bw1, bw2, vec, gmat)

    out = out2d.reshape(n, img_h, img_w, cout)            # free reshape of the dense slab
    return jnp.transpose(out, (0, 3, 1, 2))               # NHWC -> NCHW (model boundary)


# ----------------------------- pure-JAX reference -----------------------------

def conv_block_ref(x_nchw, params):
    def conv(x, w_oihw, b):
        y = jax.lax.conv_general_dilated(
            x, w_oihw, window_strides=(1, 1), padding="SAME",
            dimension_numbers=("NCHW", "OIHW", "NCHW"))
        return y + b[None, :, None, None]

    def bnr(y, g, be):
        mean = jnp.mean(y, axis=(0, 2, 3), keepdims=True)
        var = jnp.mean((y - mean) ** 2, axis=(0, 2, 3), keepdims=True)
        o = (y - mean) * jax.lax.rsqrt(var + 1e-5)
        o = o * g[None, :, None, None] + be[None, :, None, None]
        return jnp.maximum(o, 0.0)

    h = bnr(conv(x_nchw, params["w1_oihw"], params["b1"]), params["gamma1"], params["beta1"])
    h = bnr(conv(h, params["w2_oihw"], params["b2"]), params["gamma2"], params["beta2"])
    return h


# ----------------------------- main -----------------------------

if __name__ == "__main__":
    key = jax.random.PRNGKey(0)
    N, Cin, Cout, H, W = 2, 4, 8, 16, 16

    kx, k1, k2, k3, k4, k5, k6, k7, k8 = jax.random.split(key, 9)
    x = jax.random.normal(kx, (N, Cin, H, W), jnp.float32)

    # PyTorch-shaped parameters: Conv2d weight OIHW, bias (Cout,), BN gamma/beta (Cout,).
    w1_oihw = 0.1 * jax.random.normal(k1, (Cout, Cin, 3, 3), jnp.float32)
    b1 = 0.1 * jax.random.normal(k2, (Cout,), jnp.float32)
    gamma1 = 1.0 + 0.1 * jax.random.normal(k3, (Cout,), jnp.float32)
    beta1 = 0.1 * jax.random.normal(k4, (Cout,), jnp.float32)
    w2_oihw = 0.1 * jax.random.normal(k5, (Cout, Cout, 3, 3), jnp.float32)
    b2 = 0.1 * jax.random.normal(k6, (Cout,), jnp.float32)
    gamma2 = 1.0 + 0.1 * jax.random.normal(k7, (Cout,), jnp.float32)
    beta2 = 0.1 * jax.random.normal(k8, (Cout,), jnp.float32)

    params = dict(w1_oihw=w1_oihw, b1=b1, gamma1=gamma1, beta1=beta1,
                  w2_oihw=w2_oihw, b2=b2, gamma2=gamma2, beta2=beta2)

    out = jax.block_until_ready(jax.jit(conv_block_forward)(x, params))
    ref = jax.block_until_ready(conv_block_ref(x, params))

    assert out.shape == (N, Cout, H, W), out.shape
    # Tolerance accounts for bf16 MXU operands (f32 accumulation) vs. the f32 reference.
    err = float(jnp.max(jnp.abs(out - ref)))
    assert jnp.allclose(out, ref, rtol=2e-2, atol=2e-2), err
    print("KERNEL_OK")
</pallas_src>

<mosaic_0001>
module attributes {stable_mosaic.version = 11 : i64} {
  func.func @_conv_block_kernel(%arg0: i32, %arg1: memref<32x128xf32, #tpu.memory_space<vmem>>, %arg2: memref<3x128x128xbf16, #tpu.memory_space<vmem>>, %arg3: memref<3x128x128xbf16, #tpu.memory_space<vmem>>, %arg4: memref<6x1x128xf32, #tpu.memory_space<vmem>>, %arg5: memref<128x128xf32, #tpu.memory_space<vmem>>, %arg6: memref<32x128xf32, #tpu.memory_space<vmem>>) attributes {dimension_semantics = [#tpu.dimension_semantics<arbitrary>], iteration_bounds = array<i64: 1>, scalar_prefetch = 0 : i64, scratch_operands = 0 : i64, tpu.core_type = #tpu.core_type<tc>, window_params = [{pipeline_mode = #tpu.pipeline_mode<synchronous>, transform_indices = @transform_0, window_bounds = array<i64: 32, 128>}, {pipeline_mode = #tpu.pipeline_mode<synchronous>, transform_indices = @transform_1, window_bounds = array<i64: 3, 128, 128>}, {pipeline_mode = #tpu.pipeline_mode<synchronous>, transform_indices = @transform_2, window_bounds = array<i64: 3, 128, 128>}, {pipeline_mode = #tpu.pipeline_mode<synchronous>, transform_indices = @transform_3, window_bounds = array<i64: 6, 1, 128>}, {pipeline_mode = #tpu.pipeline_mode<synchronous>, transform_indices = @transform_4, window_bounds = array<i64: 128, 128>}, {pipeline_mode = #tpu.pipeline_mode<synchronous>, transform_indices = @transform_5, window_bounds = array<i64: 32, 128>}]} {
    %0 = tpu.iota {dimensions = array<i32: 0>} : vector<32x1xi32>
    %c16_i32 = arith.constant 16 : i32
    %1 = vector.broadcast %c16_i32 : i32 to vector<32x1xi32>
    %2 = arith.remsi %0, %1 : vector<32x1xi32>
    %c0_i32 = arith.constant 0 : i32
    %3 = vector.broadcast %c0_i32 : i32 to vector<32x1xi32>
    %4 = arith.cmpi eq, %2, %3 : vector<32x1xi32>
    %c15_i32 = arith.constant 15 : i32
    %5 = vector.broadcast %c15_i32 : i32 to vector<32x1xi32>
    %6 = arith.cmpi eq, %2, %5 : vector<32x1xi32>
    %c0 = arith.constant 0 : index
    %c0_0 = arith.constant 0 : index
    %7 = vector.load %arg5[%c0, %c0_0] : memref<128x128xf32, #tpu.memory_space<vmem>>, vector<128x128xf32>
    %c0_1 = arith.constant 0 : index
    %c0_2 = arith.constant 0 : index
    %8 = vector.load %arg1[%c0_1, %c0_2] : memref<32x128xf32, #tpu.memory_space<vmem>>, vector<32x128xf32>
    %c0_3 = arith.constant 0 : index
    %c0_4 = arith.constant 0 : index
    %c0_5 = arith.constant 0 : index
    %9 = vector.load %arg4[%c0_3, %c0_4, %c0_5] : memref<6x1x128xf32, #tpu.memory_space<vmem>>, vector<1x1x128xf32>
    %10 = vector.shape_cast %9 : vector<1x1x128xf32> to vector<1x128xf32>
    %c1_i32 = arith.constant 1 : i32
    %11 = tpu.dynamic_rotate %8 by %c1_i32 dim 0 : vector<32x128xf32>, i32 -> vector<32x128xf32>
    %cst = arith.constant 0.000000e+00 : f32
    %12 = vector.shape_cast %4 : vector<32x1xi1> to vector<32x1xi1>
    %13 = vector.broadcast %12 : vector<32x1xi1> to vector<32x128xi1>
    %14 = vector.broadcast %cst : f32 to vector<32x128xf32>
    %15 = arith.select %13, %14, %11 : vector<32x128xi1>, vector<32x128xf32>
    %c31_i32 = arith.constant 31 : i32
    %16 = tpu.dynamic_rotate %8 by %c31_i32 dim 0 : vector<32x128xf32>, i32 -> vector<32x128xf32>
    %cst_6 = arith.constant 0.000000e+00 : f32
    %17 = vector.shape_cast %6 : vector<32x1xi1> to vector<32x1xi1>
    %18 = vector.broadcast %17 : vector<32x1xi1> to vector<32x128xi1>
    %19 = vector.broadcast %cst_6 : f32 to vector<32x128xf32>
    %20 = arith.select %18, %19, %16 : vector<32x128xi1>, vector<32x128xf32>
    %21 = arith.truncf %15 : vector<32x128xf32> to vector<32x128xbf16>
    %c0_7 = arith.constant 0 : index
    %c0_8 = arith.constant 0 : index
    %c0_9 = arith.constant 0 : index
    %22 = vector.load %arg2[%c0_7, %c0_8, %c0_9] : memref<3x128x128xbf16, #tpu.memory_space<vmem>>, vector<1x128x128xbf16>
    %23 = vector.shape_cast %22 : vector<1x128x128xbf16> to vector<128x128xbf16>
    %cst_10 = arith.constant dense<0.000000e+00> : vector<32x128xf32>
    %24 = tpu.matmul %21, %23, %cst_10 {dimension_numbers = #tpu.dot_dimension_numbers<[1], [0], [0], [1], [0, 0, 1, 1], [], []>} : vector<32x128xbf16>, vector<128x128xbf16>, vector<32x128xf32> -> vector<32x128xf32>
    %25 = arith.truncf %8 : vector<32x128xf32> to vector<32x128xbf16>
    %c1 = arith.constant 1 : index
    %c0_11 = arith.constant 0 : index
    %c0_12 = arith.constant 0 : index
    %26 = vector.load %arg2[%c1, %c0_11, %c0_12] : memref<3x128x128xbf16, #tpu.memory_space<vmem>>, vector<1x128x128xbf16>
    %27 = vector.shape_cast %26 : vector<1x128x128xbf16> to vector<128x128xbf16>
    %cst_13 = arith.constant dense<0.000000e+00> : vector<32x128xf32>
    %28 = tpu.matmul %25, %27, %cst_13 {dimension_numbers = #tpu.dot_dimension_numbers<[1], [0], [0], [1], [0, 0, 1, 1], [], []>} : vector<32x128xbf16>, vector<128x128xbf16>, vector<32x128xf32> -> vector<32x128xf32>
    %29 = arith.addf %24, %28 : vector<32x128xf32>
    %30 = arith.truncf %20 : vector<32x128xf32> to vector<32x128xbf16>
    %c2 = arith.constant 2 : index
    %c0_14 = arith.constant 0 : index
    %c0_15 = arith.constant 0 : index
    %31 = vector.load %arg2[%c2, %c0_14, %c0_15] : memref<3x128x128xbf16, #tpu.memory_space<vmem>>, vector<1x128x128xbf16>
    %32 = vector.shape_cast %31 : vector<1x128x128xbf16> to vector<128x128xbf16>
    %cst_16 = arith.constant dense<0.000000e+00> : vector<32x128xf32>
    %33 = tpu.matmul %30, %32, %cst_16 {dimension_numbers = #tpu.dot_dimension_numbers<[1], [0], [0], [1], [0, 0, 1, 1], [], []>} : vector<32x128xbf16>, vector<128x128xbf16>, vector<32x128xf32> -> vector<32x128xf32>
    %34 = arith.addf %29, %33 : vector<32x128xf32>
    %35 = vector.broadcast %10 : vector<1x128xf32> to vector<32x128xf32>
    %36 = arith.addf %34, %35 : vector<32x128xf32>
    %c1_17 = arith.constant 1 : index
    %c0_18 = arith.constant 0 : index
    %c0_19 = arith.constant 0 : index
    %37 = vector.load %arg4[%c1_17, %c0_18, %c0_19] : memref<6x1x128xf32, #tpu.memory_space<vmem>>, vector<1x1x128xf32>
    %38 = vector.shape_cast %37 : vector<1x1x128xf32> to vector<1x128xf32>
    %c2_20 = arith.constant 2 : index
    %c0_21 = arith.constant 0 : index
    %c0_22 = arith.constant 0 : index
    %39 = vector.load %arg4[%c2_20, %c0_21, %c0_22] : memref<6x1x128xf32, #tpu.memory_space<vmem>>, vector<1x1x128xf32>
    %40 = vector.shape_cast %39 : vector<1x1x128xf32> to vector<1x128xf32>
    %cst_23 = arith.constant dense<0.000000e+00> : vector<128xf32>
    %41 = vector.multi_reduction <add>, %36, %cst_23 [0] : vector<32x128xf32> to vector<128xf32>
    %42 = vector.shape_cast %41 : vector<128xf32> to vector<1x128xf32>
    %cst_24 = arith.constant dense<0.000000e+00> : vector<1x128xf32>
    %43 = tpu.matmul %42, %7, %cst_24 {dimension_numbers = #tpu.dot_dimension_numbers<[1], [0], [0], [1], [0, 0, 1, 1], [], []>} : vector<1x128xf32>, vector<128x128xf32>, vector<1x128xf32> -> vector<1x128xf32>
    %cst_25 = arith.constant 0.001953125 : f32
    %44 = vector.broadcast %cst_25 : f32 to vector<1x128xf32>
    %45 = arith.mulf %43, %44 : vector<1x128xf32>
    %46 = vector.broadcast %45 : vector<1x128xf32> to vector<32x128xf32>
    %47 = arith.subf %36, %46 : vector<32x128xf32>
    %48 = arith.mulf %47, %47 : vector<32x128xf32>
    %cst_26 = arith.constant dense<0.000000e+00> : vector<128xf32>
    %49 = vector.multi_reduction <add>, %48, %cst_26 [0] : vector<32x128xf32> to vector<128xf32>
    %50 = vector.shape_cast %49 : vector<128xf32> to vector<1x128xf32>
    %cst_27 = arith.constant dense<0.000000e+00> : vector<1x128xf32>
    %51 = tpu.matmul %50, %7, %cst_27 {dimension_numbers = #tpu.dot_dimension_numbers<[1], [0], [0], [1], [0, 0, 1, 1], [], []>} : vector<1x128xf32>, vector<128x128xf32>, vector<1x128xf32> -> vector<1x128xf32>
    %cst_28 = arith.constant 0.001953125 : f32
    %52 = vector.broadcast %cst_28 : f32 to vector<1x128xf32>
    %53 = arith.mulf %51, %52 : vector<1x128xf32>
    %cst_29 = arith.constant 9.99999974E-6 : f32
    %54 = vector.broadcast %cst_29 : f32 to vector<1x128xf32>
    %55 = arith.addf %53, %54 : vector<1x128xf32>
    %56 = math.rsqrt %55 : vector<1x128xf32>
    %57 = arith.mulf %56, %38 : vector<1x128xf32>
    %58 = vector.broadcast %57 : vector<1x128xf32> to vector<32x128xf32>
    %59 = arith.mulf %47, %58 : vector<32x128xf32>
    %60 = vector.broadcast %40 : vector<1x128xf32> to vector<32x128xf32>
    %61 = arith.addf %59, %60 : vector<32x128xf32>
    %cst_30 = arith.constant 0.000000e+00 : f32
    %62 = vector.broadcast %cst_30 : f32 to vector<32x128xf32>
    %63 = arith.maximumf %61, %62 : vector<32x128xf32>
    %c3 = arith.constant 3 : index
    %c0_31 = arith.constant 0 : index
    %c0_32 = arith.constant 0 : index
    %64 = vector.load %arg4[%c3, %c0_31, %c0_32] : memref<6x1x128xf32, #tpu.memory_space<vmem>>, vector<1x1x128xf32>
    %65 = vector.shape_cast %64 : vector<1x1x128xf32> to vector<1x128xf32>
    %c1_i32_33 = arith.constant 1 : i32
    %66 = tpu.dynamic_rotate %63 by %c1_i32_33 dim 0 : vector<32x128xf32>, i32 -> vector<32x128xf32>
    %cst_34 = arith.constant 0.000000e+00 : f32
    %67 = vector.shape_cast %4 : vector<32x1xi1> to vector<32x1xi1>
    %68 = vector.broadcast %67 : vector<32x1xi1> to vector<32x128xi1>
    %69 = vector.broadcast %cst_34 : f32 to vector<32x128xf32>
    %70 = arith.select %68, %69, %66 : vector<32x128xi1>, vector<32x128xf32>
    %c31_i32_35 = arith.constant 31 : i32
    %71 = tpu.dynamic_rotate %63 by %c31_i32_35 dim 0 : vector<32x128xf32>, i32 -> vector<32x128xf32>
    %cst_36 = arith.constant 0.000000e+00 : f32
    %72 = vector.shape_cast %6 : vector<32x1xi1> to vector<32x1xi1>
    %73 = vector.broadcast %72 : vector<32x1xi1> to vector<32x128xi1>
    %74 = vector.broadcast %cst_36 : f32 to vector<32x128xf32>
    %75 = arith.select %73, %74, %71 : vector<32x128xi1>, vector<32x128xf32>
    %76 = arith.truncf %70 : vector<32x128xf32> to vector<32x128xbf16>
    %c0_37 = arith.constant 0 : index
    %c0_38 = arith.constant 0 : index
    %c0_39 = arith.constant 0 : index
    %77 = vector.load %arg3[%c0_37, %c0_38, %c0_39] : memref<3x128x128xbf16, #tpu.memory_space<vmem>>, vector<1x128x128xbf16>
    %78 = vector.shape_cast %77 : vector<1x128x128xbf16> to vector<128x128xbf16>
    %cst_40 = arith.constant dense<0.000000e+00> : vector<32x128xf32>
    %79 = tpu.matmul %76, %78, %cst_40 {dimension_numbers = #tpu.dot_dimension_numbers<[1], [0], [0], [1], [0, 0, 1, 1], [], []>} : vector<32x128xbf16>, vector<128x128xbf16>, vector<32x128xf32> -> vector<32x128xf32>
    %80 = arith.truncf %63 : vector<32x128xf32> to vector<32x128xbf16>
    %c1_41 = arith.constant 1 : index
    %c0_42 = arith.constant 0 : index
    %c0_43 = arith.constant 0 : index
    %81 = vector.load %arg3[%c1_41, %c0_42, %c0_43] : memref<3x128x128xbf16, #tpu.memory_space<vmem>>, vector<1x128x128xbf16>
    %82 = vector.shape_cast %81 : vector<1x128x128xbf16> to vector<128x128xbf16>
    %cst_44 = arith.constant dense<0.000000e+00> : vector<32x128xf32>
    %83 = tpu.matmul %80, %82, %cst_44 {dimension_numbers = #tpu.dot_dimension_numbers<[1], [0], [0], [1], [0, 0, 1, 1], [], []>} : vector<32x128xbf16>, vector<128x128xbf16>, vector<32x128xf32> -> vector<32x128xf32>
    %84 = arith.addf %79, %83 : vector<32x128xf32>
    %85 = arith.truncf %75 : vector<32x128xf32> to vector<32x128xbf16>
    %c2_45 = arith.constant 2 : index
    %c0_46 = arith.constant 0 : index
    %c0_47 = arith.constant 0 : index
    %86 = vector.load %arg3[%c2_45, %c0_46, %c0_47] : memref<3x128x128xbf16, #tpu.memory_space<vmem>>, vector<1x128x128xbf16>
    %87 = vector.shape_cast %86 : vector<1x128x128xbf16> to vector<128x128xbf16>
    %cst_48 = arith.constant dense<0.000000e+00> : vector<32x128xf32>
    %88 = tpu.matmul %85, %87, %cst_48 {dimension_numbers = #tpu.dot_dimension_numbers<[1], [0], [0], [1], [0, 0, 1, 1], [], []>} : vector<32x128xbf16>, vector<128x128xbf16>, vector<32x128xf32> -> vector<32x128xf32>
    %89 = arith.addf %84, %88 : vector<32x128xf32>
    %90 = vector.broadcast %65 : vector<1x128xf32> to vector<32x128xf32>
    %91 = arith.addf %89, %90 : vector<32x128xf32>
    %c4 = arith.constant 4 : index
    %c0_49 = arith.constant 0 : index
    %c0_50 = arith.constant 0 : index
    %92 = vector.load %arg4[%c4, %c0_49, %c0_50] : memref<6x1x128xf32, #tpu.memory_space<vmem>>, vector<1x1x128xf32>
    %93 = vector.shape_cast %92 : vector<1x1x128xf32> to vector<1x128xf32>
    %c5 = arith.constant 5 : index
    %c0_51 = arith.constant 0 : index
    %c0_52 = arith.constant 0 : index
    %94 = vector.load %arg4[%c5, %c0_51, %c0_52] : memref<6x1x128xf32, #tpu.memory_space<vmem>>, vector<1x1x128xf32>
    %95 = vector.shape_cast %94 : vector<1x1x128xf32> to vector<1x128xf32>
    %cst_53 = arith.constant dense<0.000000e+00> : vector<128xf32>
    %96 = vector.multi_reduction <add>, %91, %cst_53 [0] : vector<32x128xf32> to vector<128xf32>
    %97 = vector.shape_cast %96 : vector<128xf32> to vector<1x128xf32>
    %cst_54 = arith.constant dense<0.000000e+00> : vector<1x128xf32>
    %98 = tpu.matmul %97, %7, %cst_54 {dimension_numbers = #tpu.dot_dimension_numbers<[1], [0], [0], [1], [0, 0, 1, 1], [], []>} : vector<1x128xf32>, vector<128x128xf32>, vector<1x128xf32> -> vector<1x128xf32>
    %cst_55 = arith.constant 0.001953125 : f32
    %99 = vector.broadcast %cst_55 : f32 to vector<1x128xf32>
    %100 = arith.mulf %98, %99 : vector<1x128xf32>
    %101 = vector.broadcast %100 : vector<1x128xf32> to vector<32x128xf32>
    %102 = arith.subf %91, %101 : vector<32x128xf32>
    %103 = arith.mulf %102, %102 : vector<32x128xf32>
    %cst_56 = arith.constant dense<0.000000e+00> : vector<128xf32>
    %104 = vector.multi_reduction <add>, %103, %cst_56 [0] : vector<32x128xf32> to vector<128xf32>
    %105 = vector.shape_cast %104 : vector<128xf32> to vector<1x128xf32>
    %cst_57 = arith.constant dense<0.000000e+00> : vector<1x128xf32>
    %106 = tpu.matmul %105, %7, %cst_57 {dimension_numbers = #tpu.dot_dimension_numbers<[1], [0], [0], [1], [0, 0, 1, 1], [], []>} : vector<1x128xf32>, vector<128x128xf32>, vector<1x128xf32> -> vector<1x128xf32>
    %cst_58 = arith.constant 0.001953125 : f32
    %107 = vector.broadcast %cst_58 : f32 to vector<1x128xf32>
    %108 = arith.mulf %106, %107 : vector<1x128xf32>
    %cst_59 = arith.constant 9.99999974E-6 : f32
    %109 = vector.broadcast %cst_59 : f32 to vector<1x128xf32>
    %110 = arith.addf %108, %109 : vector<1x128xf32>
    %111 = math.rsqrt %110 : vector<1x128xf32>
    %112 = arith.mulf %111, %93 : vector<1x128xf32>
    %113 = vector.broadcast %112 : vector<1x128xf32> to vector<32x128xf32>
    %114 = arith.mulf %102, %113 : vector<32x128xf32>
    %115 = vector.broadcast %95 : vector<1x128xf32> to vector<32x128xf32>
    %116 = arith.addf %114, %115 : vector<32x128xf32>
    %cst_60 = arith.constant 0.000000e+00 : f32
    %117 = vector.broadcast %cst_60 : f32 to vector<32x128xf32>
    %118 = arith.maximumf %116, %117 : vector<32x128xf32>
    %c0_61 = arith.constant 0 : index
    %c0_62 = arith.constant 0 : index
    %119 = vector.load %arg6[%c0_61, %c0_62] : memref<32x128xf32, #tpu.memory_space<vmem>>, vector<32x128xf32>
    tpu.vector_store %arg6[%c0_61, %c0_62], %118 {strides = array<i32>} : memref<32x128xf32, #tpu.memory_space<vmem>>, vector<32x128xf32>,
    return
  }
  func.func @transform_0(%arg0: i32) -> (i32, i32) {
    %c0_i32 = arith.constant 0 : i32
    %c0_i32_0 = arith.constant 0 : i32
    %c0_i32_1 = arith.constant 0 : i32
    return %c0_i32, %c0_i32_0 : i32, i32
  }
  func.func @transform_1(%arg0: i32) -> (i32, i32, i32) {
    %c0_i32 = arith.constant 0 : i32
    %c0_i32_0 = arith.constant 0 : i32
    %c0_i32_1 = arith.constant 0 : i32
    %c0_i32_2 = arith.constant 0 : i32
    return %c0_i32, %c0_i32_0, %c0_i32_1 : i32, i32, i32
  }
  func.func @transform_2(%arg0: i32) -> (i32, i32, i32) {
    %c0_i32 = arith.constant 0 : i32
    %c0_i32_0 = arith.constant 0 : i32
    %c0_i32_1 = arith.constant 0 : i32
    %c0_i32_2 = arith.constant 0 : i32
    return %c0_i32, %c0_i32_0, %c0_i32_1 : i32, i32, i32
  }
  func.func @transform_3(%arg0: i32) -> (i32, i32, i32) {
    %c0_i32 = arith.constant 0 : i32
    %c0_i32_0 = arith.constant 0 : i32
    %c0_i32_1 = arith.constant 0 : i32
    %c0_i32_2 = arith.constant 0 : i32
    return %c0_i32, %c0_i32_0, %c0_i32_1 : i32, i32, i32
  }
  func.func @transform_4(%arg0: i32) -> (i32, i32) {
    %c0_i32 = arith.constant 0 : i32
    %c0_i32_0 = arith.constant 0 : i32
    %c0_i32_1 = arith.constant 0 : i32
    return %c0_i32, %c0_i32_0 : i32, i32
  }
  func.func @transform_5(%arg0: i32) -> (i32, i32) {
    %c0_i32 = arith.constant 0 : i32
    %c0_i32_0 = arith.constant 0 : i32
    %c0_i32_1 = arith.constant 0 : i32
    return %c0_i32, %c0_i32_0 : i32, i32
  }
}

</mosaic_0001>

<llo_original>
// kernel: tile.33
$region0: #{tile.33}
  #allocation0 [shape = 's32[1]{0}', space=sflag, size = 0x4, scoped, tag = 'scoped memory for tile.33']
  %s0 = inlined_call_operand.vmem [shape: f32[8], index: 0, kind: input, shape index: {}]
  %s1 = inlined_call_operand.vmem [shape: f32[16,8], index: 1, kind: output, shape index: {}]
  // Predicated region
  $region2: #{tile.33} parent=0 // pred_check
    _
  $region3: #{tile.33} parent=0 // pred_check_branch
    %3 = sbr.rel (0) target = $region5
  $region4: #{tile.33} parent=0 // pred_region
    _
  $region5: #{tile.33} parent=0 // pred_fallthru
    _
  %v4 = vld [vmem:[%s0] ss:$0 sm:$0xff]
  %5 = vst [vmem:[%s1] sm:$0xff] %v4
  %s6 = scalar_lea.vmem %s1, 8
  %7 = vst [vmem:[%s6] sm:$0xff] %v4

// kernel: tile.54
$region0: #{tile.54}
  %s0 = inlined_call_operand.vmem [shape: f32[16,8], index: 0, kind: input, shape index: {}]
  %s1 = inlined_call_operand.vmem [shape: f32[1,1,128], index: 1, kind: output, shape index: {}]
  $region1: #{tile.54} parent=0
    #allocation0 [shape = 'u8[4096]{0}', space=vmem, size = 0x1000, scoped, tag = 'scoped mem for output reshape']
    %v2 = vld [vmem:[%s0] sm:$0x1]
    %vm3 = vcmask 64512
    %4 = vst.msk [vmem:[#allocation0] sm:$0x1] %vm3, %v2
    %s5 = scalar_lea.vmem %s0, 15
    %v6 = vld [vmem:[%s5] sm:$0x1]
    %7 = vrot.lane.b32.xlu0 %v6, 120
    %v8 = vpop.permute.xlu0 %7
    %vm9 = vcmask 1048512
    %10 = vst.msk [vmem:[#allocation0] sm:$0x1] %vm9, %v8
    %s11 = scalar_lea.vmem %s0, 14
    %v12 = vld [vmem:[%s11] sm:$0x1]
    %13 = vrot.lane.b32.xlu0 %v12, 112
    %v14 = vpop.permute.xlu0 %13
    %vm15 = vcmask 982912
    %16 = vst.msk [vmem:[#allocation0] sm:$0x1] %vm15, %v14
    %s17 = scalar_lea.vmem %s0, 13
    %v18 = vld [vmem:[%s17] sm:$0x1]
    %19 = vrot.lane.b32.xlu0 %v18, 104
    %v20 = vpop.permute.xlu0 %19
    %vm21 = vcmask 917312
    %22 = vst.msk [vmem:[#allocation0] sm:$0x1] %vm21, %v20
    %s23 = scalar_lea.vmem %s0, 12
    %v24 = vld [vmem:[%s23] sm:$0x1]
    %25 = vrot.lane.b32.xlu0 %v24, 96
    %v26 = vpop.permute.xlu0 %25
    %vm27 = vcmask 851712
    %28 = vst.msk [vmem:[#allocation0] sm:$0x1] %vm27, %v26
    %s29 = scalar_lea.vmem %s0, 11
    %v30 = vld [vmem:[%s29] sm:$0x1]
    %31 = vrot.lane.b32.xlu0 %v30, 88
    %v32 = vpop.permute.xlu0 %31
    %vm33 = vcmask 786112
    %34 = vst.msk [vmem:[#allocation0] sm:$0x1] %vm33, %v32
    %s35 = scalar_lea.vmem %s0, 10
    %v36 = vld [vmem:[%s35] sm:$0x1]
    %37 = vrot.lane.b32.xlu0 %v36, 80
    %v38 = vpop.permute.xlu0 %37
    %vm39 = vcmask 720512
    %40 = vst.msk [vmem:[#allocation0] sm:$0x1] %vm39, %v38
    %s41 = scalar_lea.vmem %s0, 9
    %v42 = vld [vmem:[%s41] sm:$0x1]
    %43 = vrot.lane.b32.xlu0 %v42, 72
    %v44 = vpop.permute.xlu0 %43
    %vm45 = vcmask 654912
    %46 = vst.msk [vmem:[#allocation0] sm:$0x1] %vm45, %v44
    %s47 = scalar_lea.vmem %s0, 8
    %v48 = vld [vmem:[%s47] sm:$0x1]
    %49 = vrot.lane.b32.xlu0 %v48, 64
    %v50 = vpop.permute.xlu0 %49
    %vm51 = vcmask 589312
    %52 = vst.msk [vmem:[#allocation0] sm:$0x1] %vm51, %v50
    %s53 = scalar_lea.vmem %s0, 7
    %v54 = vld [vmem:[%s53] sm:$0x1]
    %55 = vrot.lane.b32.xlu0 %v54, 56
    %v56 = vpop.permute.xlu0 %55
    %vm57 = vcmask 523712
    %58 = vst.msk [vmem:[#allocation0] sm:$0x1] %vm57, %v56
    %s59 = scalar_lea.vmem %s0, 6
    %v60 = vld [vmem:[%s59] sm:$0x1]
    %61 = vrot.lane.b32.xlu0 %v60, 48
    %v62 = vpop.permute.xlu0 %61
    %vm63 = vcmask 458112
    %64 = vst.msk [vmem:[#allocation0] sm:$0x1] %vm63, %v62
    %s65 = scalar_lea.vmem %s0, 5
    %v66 = vld [vmem:[%s65] sm:$0x1]
    %67 = vrot.lane.b32.xlu0 %v66, 40
    %v68 = vpop.permute.xlu0 %67
    %vm69 = vcmask 392512
    %70 = vst.msk [vmem:[#allocation0] sm:$0x1] %vm69, %v68
    %s71 = scalar_lea.vmem %s0, 4
    %v72 = vld [vmem:[%s71] sm:$0x1]
    %73 = vrot.lane.b32.xlu0 %v72, 32
    %v74 = vpop.permute.xlu0 %73
    %vm75 = vcmask 326912
    %76 = vst.msk [vmem:[#allocation0] sm:$0x1] %vm75, %v74
    %s77 = scalar_lea.vmem %s0, 3
    %v78 = vld [vmem:[%s77] sm:$0x1]
    %79 = vrot.lane.b32.xlu0 %v78, 24
    %v80 = vpop.permute.xlu0 %79
    %vm81 = vcmask 261312
    %82 = vst.msk [vmem:[#allocation0] sm:$0x1] %vm81, %v80
    %s83 = scalar_lea.vmem %s0, 2
    %v84 = vld [vmem:[%s83] sm:$0x1]
    %85 = vrot.lane.b32.xlu0 %v84, 16
    %v86 = vpop.permute.xlu0 %85
    %vm87 = vcmask 195712
    %88 = vst.msk [vmem:[#allocation0] sm:$0x1] %vm87, %v86
    %s89 = scalar_lea.vmem %s0, 1
    %v90 = vld [vmem:[%s89] sm:$0x1]
    %91 = vrot.lane.b32.xlu0 %v90, 8
    %v92 = vpop.permute.xlu0 %91
    %vm93 = vcmask 130112
    %94 = vst.msk [vmem:[#allocation0] sm:$0x1] %vm93, %v92
    %s96 = sshll.u32 1, 1
    %s97 = ssub.s32 %s96, 1
    %v99 = vld [vmem:[#allocation0] sm:%s97]
    %s100 = sshll.u32 1, 1
    %s101 = ssub.s32 %s100, 1
    %102 = vst [vmem:[%s1] sm:%s101] %v99

// kernel: conv_block_forward.1
$region0: #{conv_block_forward.1}
  #allocation0 [shape = 'u32[]', space=smem, size = 0x4, offset = 0x4, fixed_abs, tag = 'smem constant byte address 0x4 - core index']
  #allocation1 [shape = 'u32[144,128]{1,0:T(1,128)}', space=vmem, size = 0x12000, scoped, tag = 'internal scratch']
  %s0 = inlined_call_operand.vmem [shape: f32[32,128], index: 0, kind: input, shape index: {}]
  %s1 = inlined_call_operand.vmem [shape: bf16[3,128,128], index: 1, kind: input, shape index: {}]
  %s2 = inlined_call_operand.vmem [shape: bf16[3,128,128], index: 2, kind: input, shape index: {}]
  %s3 = inlined_call_operand.vmem [shape: f32[6,1,128], index: 3, kind: input, shape index: {}]
  %s4 = inlined_call_operand.vmem [shape: f32[128,128], index: 4, kind: input, shape index: {}]
  %s5 = inlined_call_operand.vmem [shape: f32[32,128], index: 5, kind: output, shape index: {}]
  %s6 = sld [smem:[#allocation0]]
  $region30: #{conv_block_forward.1} parent=0
    _
  %s8 = ssub.s32 1, %s6
  %s9 = scalar_select 0, %s8, %s6
  // Predicated region
  $region2: #{conv_block_forward.1} parent=0 // pred_check
    _
  $region3: #{conv_block_forward.1} parent=0 // pred_check_branch
    %11 = sbr.rel (0) target = $region5
  $region4: #{conv_block_forward.1} parent=0 // pred_region
    _
  $region5: #{conv_block_forward.1} parent=0 // pred_fallthru
    _
  // Predicated region
  $region6: #{conv_block_forward.1} parent=0 // pred_check
    _
  $region7: #{conv_block_forward.1} parent=0 // pred_check_branch
    %13 = sbr.rel (0) target = $region9
  $region8: #{conv_block_forward.1} parent=0 // pred_region
    _
  $region9: #{conv_block_forward.1} parent=0 // pred_fallthru
    _
  // Predicated region
  $region10: #{conv_block_forward.1} parent=0 // pred_check
    _
  $region11: #{conv_block_forward.1} parent=0 // pred_check_branch
    %15 = sbr.rel (0) target = $region13
  $region12: #{conv_block_forward.1} parent=0 // pred_region
    _
  $region13: #{conv_block_forward.1} parent=0 // pred_fallthru
    _
  // Predicated region
  $region14: #{conv_block_forward.1} parent=0 // pred_check
    _
  $region15: #{conv_block_forward.1} parent=0 // pred_check_branch
    %17 = sbr.rel (0) target = $region17
  $region16: #{conv_block_forward.1} parent=0 // pred_region
    _
  $region17: #{conv_block_forward.1} parent=0 // pred_fallthru
    _
  // Predicated region
  $region18: #{conv_block_forward.1} parent=0 // pred_check
    _
  $region19: #{conv_block_forward.1} parent=0 // pred_check_branch
    %19 = sbr.rel (0) target = $region21
  $region20: #{conv_block_forward.1} parent=0 // pred_region
    _
  $region21: #{conv_block_forward.1} parent=0 // pred_fallthru
    _
  %v21 = vlaneseq
  %v22 = vshrl.u32 %v21, 7
  %v23 = vadd.s32 %v22, 8
  %v24 = vadd.s32 %v22, 16
  %v25 = vadd.s32 %v22, 24
  %vm26 = vcmp.lt.s32.totalorder %v22, 0
  %v27 = vsub.s32 0, %v22
  %v28 = vsel %vm26, %v27, %v22
  %v29 = vshrl.u32 %v28, 4
  %v30 = vand.u32 %v28, 15
  %v31 = vsub.s32 0, %v30
  %v32 = vsel %vm26, %v31, %v30
  %vm33 = vcmp.lt.s32.totalorder %v23, 0
  %v34 = vsub.s32 0, %v23
  %v35 = vsel %vm33, %v34, %v23
  %v36 = vshrl.u32 %v35, 4
  %v37 = vand.u32 %v35, 15
  %v38 = vsub.s32 0, %v37
  %v39 = vsel %vm33, %v38, %v37
  %vm40 = vcmp.lt.s32.totalorder %v24, 0
  %v41 = vsub.s32 0, %v24
  %v42 = vsel %vm40, %v41, %v24
  %v43 = vshrl.u32 %v42, 4
  %v44 = vand.u32 %v42, 15
  %v45 = vsub.s32 0, %v44
  %v46 = vsel %vm40, %v45, %v44
  %vm47 = vcmp.lt.s32.totalorder %v25, 0
  %v48 = vsub.s32 0, %v25
  %v49 = vsel %vm47, %v48, %v25
  %v50 = vshrl.u32 %v49, 4
  %v51 = vand.u32 %v49, 15
  %v52 = vsub.s32 0, %v51
  %v53 = vsel %vm47, %v52, %v51
  %vm54 = vcmp.eq.s32.totalorder %v32, 0
  %vm55 = vcmp.eq.s32.totalorder %v39, 0
  %vm56 = vcmp.eq.s32.totalorder %v46, 0
  %vm57 = vcmp.eq.s32.totalorder %v53, 0
  %vm58 = vcmp.eq.s32.totalorder %v32, 15
  %vm59 = vcmp.eq.s32.totalorder %v39, 15
  %vm60 = vcmp.eq.s32.totalorder %v46, 15
  %vm61 = vcmp.eq.s32.totalorder %v53, 15
  %v62 = vld [vmem:[%s4] sm:$0xff]
  %v63 = vld [vmem:[%s4 + $0x8] sm:$0xff]
  %v64 = vld [vmem:[%s4 + $0x10] sm:$0xff]
  %v65 = vld [vmem:[%s4 + $0x18] sm:$0xff]
  %v66 = vld [vmem:[%s4 + $0x20] sm:$0xff]
  %v67 = vld [vmem:[%s4 + $0x28] sm:$0xff]
  %v68 = vld [vmem:[%s4 + $0x30] sm:$0xff]
  %v69 = vld [vmem:[%s4 + $0x38] sm:$0xff]
  %v70 = vld [vmem:[%s4 + $0x40] sm:$0xff]
  %v71 = vld [vmem:[%s4 + $0x48] sm:$0xff]
  %v72 = vld [vmem:[%s4 + $0x50] sm:$0xff]
  %v73 = vld [vmem:[%s4 + $0x58] sm:$0xff]
  %v74 = vld [vmem:[%s4 + $0x60] sm:$0xff]
  %v75 = vld [vmem:[%s4 + $0x68] sm:$0xff]
  %v76 = vld [vmem:[%s4 + $0x70] sm:$0xff]
  %v77 = vld [vmem:[%s4 + $0x78] sm:$0xff]
  %v78 = vld [vmem:[%s0] sm:$0xff]
  %v79 = vld [vmem:[%s0 + $0x8] sm:$0xff]
  %v80 = vld [vmem:[%s0 + $0x10] sm:$0xff]
  %v81 = vld [vmem:[%s0 + $0x18] sm:$0xff]
  %v82 = vld [vmem:[%s3] sm:$0x1]
  %v83 = vrot.slane %v78, 7
  %v84 = vrot.slane %v79, 7
  %v85 = vrot.slane %v80, 7
  %v86 = vrot.slane %v81, 7
  %vm87 = vcmp.lt.s32.totalorder %v22, 1
  %v88 = vsel %vm87, %v85, %v86
  %v89 = vsel %vm87, %v84, %v85
  %v90 = vsel %vm87, %v83, %v84
  %v91 = vsel %vm87, %v86, %v83
  %v92 = vsel %vm54, 1, 0
  %v93 = vsel %vm55, 1, 0
  %v94 = vsel %vm56, 1, 0
  %v95 = vsel %vm57, 1, 0
  %vm96 = vcmp.eq.s32.totalorder %v92, 1
  %vm97 = vcmp.eq.s32.totalorder %v93, 1
  %vm98 = vcmp.eq.s32.totalorder %v94, 1
  %vm99 = vcmp.eq.s32.totalorder %v95, 1
  %v100 = vsel %vm96, 0.0, %v91
  %v101 = vsel %vm97, 0.0, %v90
  %v102 = vsel %vm98, 0.0, %v89
  %v103 = vsel %vm99, 0.0, %v88
  %v104 = vrot.slane %v78, 1
  %v105 = vrot.slane %v79, 1
  %v106 = vrot.slane %v80, 1
  %v107 = vrot.slane %v81, 1
  %vm108 = vcmp.lt.s32.totalorder %v22, 7
  %v109 = vsel %vm108, %v106, %v107
  %v110 = vsel %vm108, %v105, %v106
  %v111 = vsel %vm108, %v104, %v105
  %v112 = vsel %vm108, %v107, %v104
  %v113 = vsel %vm58, 1, 0
  %v114 = vsel %vm59, 1, 0
  %v115 = vsel %vm60, 1, 0
  %v116 = vsel %vm61, 1, 0
  %vm117 = vcmp.eq.s32.totalorder %v113, 1
  %vm118 = vcmp.eq.s32.totalorder %v114, 1
  %vm119 = vcmp.eq.s32.totalorder %v115, 1
  %vm120 = vcmp.eq.s32.totalorder %v116, 1
  %v121 = vsel %vm117, 0.0, %v111
  %v122 = vsel %vm118, 0.0, %v110
  %v123 = vsel %vm119, 0.0, %v109
  %v124 = vsel %vm120, 0.0, %v112
  %v125 = vpack.c.bf16 %v101, %v100
  %v126 = vpack.c.bf16 %v103, %v102
  %v127 = vld [vmem:[%s1] sm:$0xf]
  %v128 = vld [vmem:[%s1 + $0x4] sm:$0xf]
  %v129 = vld [vmem:[%s1 + $0x8] sm:$0xf]
  %v130 = vld [vmem:[%s1 + $0xc] sm:$0xf]
  %v131 = vld [vmem:[%s1 + $0x10] sm:$0xf]
  %v132 = vld [vmem:[%s1 + $0x14] sm:$0xf]
  %v133 = vld [vmem:[%s1 + $0x18] sm:$0xf]
  %v134 = vld [vmem:[%s1 + $0x1c] sm:$0xf]
  %v135 = vld [vmem:[%s1 + $0x20] sm:$0xf]
  %v136 = vld [vmem:[%s1 + $0x24] sm:$0xf]
  %v137 = vld [vmem:[%s1 + $0x28] sm:$0xf]
  %v138 = vld [vmem:[%s1 + $0x2c] sm:$0xf]
  %v139 = vld [vmem:[%s1 + $0x30] sm:$0xf]
  %v140 = vld [vmem:[%s1 + $0x34] sm:$0xf]
  %v141 = vld [vmem:[%s1 + $0x38] sm:$0xf]
  %v142 = vld [vmem:[%s1 + $0x3c] sm:$0xf]
  %v143 = vpack.c.bf16 %v79, %v78
  %v144 = vpack.c.bf16 %v81, %v80
  %s145 = scalar_lea.vmem %s1, 64
  %v146 = vld [vmem:[%s145] sm:$0xf]
  %v147 = vld [vmem:[%s145 + $0x4] sm:$0xf]
  %v148 = vld [vmem:[%s145 + $0x8] sm:$0xf]
  %v149 = vld [vmem:[%s145 + $0xc] sm:$0xf]
  %v150 = vld [vmem:[%s145 + $0x10] sm:$0xf]
  %v151 = vld [vmem:[%s145 + $0x14] sm:$0xf]
  %v152 = vld [vmem:[%s145 + $0x18] sm:$0xf]
  %v153 = vld [vmem:[%s145 + $0x1c] sm:$0xf]
  %v154 = vld [vmem:[%s145 + $0x20] sm:$0xf]
  %v155 = vld [vmem:[%s145 + $0x24] sm:$0xf]
  %v156 = vld [vmem:[%s145 + $0x28] sm:$0xf]
  %v157 = vld [vmem:[%s145 + $0x2c] sm:$0xf]
  %v158 = vld [vmem:[%s145 + $0x30] sm:$0xf]
  %v159 = vld [vmem:[%s145 + $0x34] sm:$0xf]
  %v160 = vld [vmem:[%s145 + $0x38] sm:$0xf]
  %v161 = vld [vmem:[%s145 + $0x3c] sm:$0xf]
  %v178 = vunpack.c.l.b16 %v146
  %v179 = vunpack.c.l.b16 %v147
  %v180 = vunpack.c.l.b16 %v148
  %v181 = vunpack.c.l.b16 %v149
  %v182 = vunpack.c.l.b16 %v150
  %v183 = vunpack.c.l.b16 %v151
  %v184 = vunpack.c.l.b16 %v152
  %v185 = vunpack.c.l.b16 %v153
  %v186 = vunpack.c.l.b16 %v154
  %v187 = vunpack.c.l.b16 %v155
  %v188 = vunpack.c.l.b16 %v156
  %v189 = vunpack.c.l.b16 %v157
  %v190 = vunpack.c.l.b16 %v158
  %v191 = vunpack.c.l.b16 %v159
  %v192 = vunpack.c.l.b16 %v160
  %v193 = vunpack.c.l.b16 %v161
  %v194 = vpack.c.b16 %v179, %v178
  %v195 = vpack.c.b16 %v181, %v180
  %v196 = vpack.c.b16 %v183, %v182
  %v197 = vpack.c.b16 %v185, %v184
  %v198 = vpack.c.b16 %v187, %v186
  %v199 = vpack.c.b16 %v189, %v188
  %v200 = vpack.c.b16 %v191, %v190
  %v201 = vpack.c.b16 %v193, %v192
  %210 = vmatprep.subr.bf16.mxu0 0
  %211 = vmatpush1.bf16.msra.mxu0 %v201
  %212 = vmatprep.subr.bf16.mxu0 0
  %213 = vmatpush1.bf16.msra.mxu0 %v200
  %214 = vmatprep.subr.bf16.mxu0 0
  %215 = vmatpush1.bf16.msra.mxu0 %v199
  %216 = vmatprep.subr.bf16.mxu0 0
  %217 = vmatpush1.bf16.msra.mxu0 %v198
  %218 = vmatprep.subr.bf16.mxu0 0
  %219 = vmatpush1.bf16.msra.mxu0 %v197
  %220 = vmatprep.subr.bf16.mxu0 0
  %221 = vmatpush1.bf16.msra.mxu0 %v196
  %222 = vmatprep.subr.bf16.mxu0 0
  %223 = vmatpush1.bf16.msra.mxu0 %v195
  %224 = vmatprep.subr.bf16.mxu0 0
  %225 = vmatpush1.bf16.msra.mxu0 %v194
  %226 = vmatprep.subr.bf16.mxu0 0
  %227 = vmatpush2.bf16.msra.mxu0 0
  %228 = vmatprep.subr.bf16.mxu0 0
  %229 = vmatpush2.bf16.msra.mxu0 0
  %230 = vmatprep.subr.bf16.mxu0 0
  %231 = vmatpush2.bf16.msra.mxu0 0
  %232 = vmatprep.subr.bf16.mxu0 0
  %233 = vmatpush2.bf16.msra.mxu0 0
  %234 = vmatprep.subr.bf16.mxu0 0
  %235 = vmatpush2.bf16.msra.mxu0 0
  %236 = vmatprep.subr.bf16.mxu0 0
  %237 = vmatpush2.bf16.msra.mxu0 0
  %238 = vmatprep.subr.bf16.mxu0 0
  %239 = vmatpush2.bf16.msra.mxu0 0
  %240 = vmatprep.subr.bf16.mxu0 0
  %241 = vmatpush2.bf16.msra.mxu0 0
  %242 = vmatprep.mubr.bf16.mxu0 0
  %243 = vmatmul.mubr.bf16.gmra.mxu0 %v143
  %v244 = vpop.f32.mrf.mxu0
  %v245 = vadd.f32 0.0, %v244
  %v246 = vpop.f32.mrf.mxu0
  %v247 = vpop.f32.mrf.mxu0
  %v248 = vadd.f32 0.0, %v247
  %v249 = vpop.f32.mrf.mxu0
  %250 = vmatprep.mubr.bf16.mxu0 0
  %251 = vmatmul.mubr.bf16.gmra.mxu0 %v144
  %v252 = vpop.f32.mrf.mxu0
  %v253 = vadd.f32 0.0, %v252
  %v254 = vpop.f32.mrf.mxu0
  %v255 = vpop.f32.mrf.mxu0
  %v256 = vadd.f32 0.0, %v255
  %v257 = vpop.f32.mrf.mxu0
  %258 = vdwg.mxu0
  %v275 = vunpack.c.l.b16 %v127
  %v276 = vunpack.c.l.b16 %v128
  %v277 = vunpack.c.l.b16 %v129
  %v278 = vunpack.c.l.b16 %v130
  %v279 = vunpack.c.l.b16 %v131
  %v280 = vunpack.c.l.b16 %v132
  %v281 = vunpack.c.l.b16 %v133
  %v282 = vunpack.c.l.b16 %v134
  %v283 = vunpack.c.l.b16 %v135
  %v284 = vunpack.c.l.b16 %v136
  %v285 = vunpack.c.l.b16 %v137
  %v286 = vunpack.c.l.b16 %v138
  %v287 = vunpack.c.l.b16 %v139
  %v288 = vunpack.c.l.b16 %v140
  %v289 = vunpack.c.l.b16 %v141
  %v290 = vunpack.c.l.b16 %v142
  %v291 = vpack.c.b16 %v276, %v275
  %v292 = vpack.c.b16 %v278, %v277
  %v293 = vpack.c.b16 %v280, %v279
  %v294 = vpack.c.b16 %v282, %v281
  %v295 = vpack.c.b16 %v284, %v283
  %v296 = vpack.c.b16 %v286, %v285
  %v297 = vpack.c.b16 %v288, %v287
  %v298 = vpack.c.b16 %v290, %v289
  %307 = vmatprep.subr.bf16.mxu0 0
  %308 = vmatpush1.bf16.msra.mxu0 %v298
  %309 = vmatprep.subr.bf16.mxu0 0
  %310 = vmatpush1.bf16.msra.mxu0 %v297
  %311 = vmatprep.subr.bf16.mxu0 0
  %312 = vmatpush1.bf16.msra.mxu0 %v296
  %313 = vmatprep.subr.bf16.mxu0 0
  %314 = vmatpush1.bf16.msra.mxu0 %v295
  %315 = vmatprep.subr.bf16.mxu0 0
  %316 = vmatpush1.bf16.msra.mxu0 %v294
  %317 = vmatprep.subr.bf16.mxu0 0
  %318 = vmatpush1.bf16.msra.mxu0 %v293
  %319 = vmatprep.subr.bf16.mxu0 0
  %320 = vmatpush1.bf16.msra.mxu0 %v292
  %321 = vmatprep.subr.bf16.mxu0 0
  %322 = vmatpush1.bf16.msra.mxu0 %v291
  %323 = vmatprep.subr.bf16.mxu0 0
  %324 = vmatpush2.bf16.msra.mxu0 0
  %325 = vmatprep.subr.bf16.mxu0 0
  %326 = vmatpush2.bf16.msra.mxu0 0
  %327 = vmatprep.subr.bf16.mxu0 0
  %328 = vmatpush2.bf16.msra.mxu0 0
  %329 = vmatprep.subr.bf16.mxu0 0
  %330 = vmatpush2.bf16.msra.mxu0 0
  %331 = vmatprep.subr.bf16.mxu0 0
  %332 = vmatpush2.bf16.msra.mxu0 0
  %333 = vmatprep.subr.bf16.mxu0 0
  %334 = vmatpush2.bf16.msra.mxu0 0
  %335 = vmatprep.subr.bf16.mxu0 0
  %336 = vmatpush2.bf16.msra.mxu0 0
  %337 = vmatprep.subr.bf16.mxu0 0
  %338 = vmatpush2.bf16.msra.mxu0 0
  %339 = vmatprep.mubr.bf16.mxu0 0
  %340 = vmatmul.mubr.bf16.gmra.mxu0 %v125
  %v341 = vpop.f32.mrf.mxu0
  %v342 = vadd.f32 %v245, %v341
  %v343 = vpop.f32.mrf.mxu0
  %v344 = vpop.f32.mrf.mxu0
  %v345 = vadd.f32 %v248, %v344
  %v346 = vpop.f32.mrf.mxu0
  %347 = vmatprep.mubr.bf16.mxu0 0
  %348 = vmatmul.mubr.bf16.gmra.mxu0 %v126
  %v349 = vpop.f32.mrf.mxu0
  %v350 = vadd.f32 %v253, %v349
  %v351 = vpop.f32.mrf.mxu0
  %v352 = vpop.f32.mrf.mxu0
  %v353 = vadd.f32 %v256, %v352
  %v354 = vpop.f32.mrf.mxu0
  %355 = vdwg.mxu0
  %v356 = vpack.c.bf16 %v122, %v121
  %v357 = vpack.c.bf16 %v124, %v123
  %s358 = scalar_lea.vmem %s1, 128
  %v359 = vld [vmem:[%s358] sm:$0xf]
  %v360 = vld [vmem:[%s358 + $0x4] sm:$0xf]
  %v361 = vld [vmem:[%s358 + $0x8] sm:$0xf]
  %v362 = vld [vmem:[%s358 + $0xc] sm:$0xf]
  %v363 = vld [vmem:[%s358 + $0x10] sm:$0xf]
  %v364 = vld [vmem:[%s358 + $0x14] sm:$0xf]
  %v365 = vld [vmem:[%s358 + $0x18] sm:$0xf]
  %v366 = vld [vmem:[%s358 + $0x1c] sm:$0xf]
  %v367 = vld [vmem:[%s358 + $0x20] sm:$0xf]
  %v368 = vld [vmem:[%s358 + $0x24] sm:$0xf]
  %v369 = vld [vmem:[%s358 + $0x28] sm:$0xf]
  %v370 = vld [vmem:[%s358 + $0x2c] sm:$0xf]
  %v371 = vld [vmem:[%s358 + $0x30] sm:$0xf]
  %v372 = vld [vmem:[%s358 + $0x34] sm:$0xf]
  %v373 = vld [vmem:[%s358 + $0x38] sm:$0xf]
  %v374 = vld [vmem:[%s358 + $0x3c] sm:$0xf]
  %v391 = vunpack.c.l.b16 %v359
  %v392 = vunpack.c.l.b16 %v360
  %v393 = vunpack.c.l.b16 %v361
  %v394 = vunpack.c.l.b16 %v362
  %v395 = vunpack.c.l.b16 %v363
  %v396 = vunpack.c.l.b16 %v364
  %v397 = vunpack.c.l.b16 %v365
  %v398 = vunpack.c.l.b16 %v366
  %v399 = vunpack.c.l.b16 %v367
  %v400 = vunpack.c.l.b16 %v368
  %v401 = vunpack.c.l.b16 %v369
  %v402 = vunpack.c.l.b16 %v370
  %v403 = vunpack.c.l.b16 %v371
  %v404 = vunpack.c.l.b16 %v372
  %v405 = vunpack.c.l.b16 %v373
  %v406 = vunpack.c.l.b16 %v374
  %v407 = vpack.c.b16 %v392, %v391
  %v408 = vpack.c.b16 %v394, %v393
  %v409 = vpack.c.b16 %v396, %v395
  %v410 = vpack.c.b16 %v398, %v397
  %v411 = vpack.c.b16 %v400, %v399
  %v412 = vpack.c.b16 %v402, %v401
  %v413 = vpack.c.b16 %v404, %v403
  %v414 = vpack.c.b16 %v406, %v405
  %423 = vmatprep.subr.bf16.mxu0 0
  %424 = vmatpush1.bf16.msra.mxu0 %v414
  %425 = vmatprep.subr.bf16.mxu0 0
  %426 = vmatpush1.bf16.msra.mxu0 %v413
  %427 = vmatprep.subr.bf16.mxu0 0
  %428 = vmatpush1.bf16.msra.mxu0 %v412
  %429 = vmatprep.subr.bf16.mxu0 0
  %430 = vmatpush1.bf16.msra.mxu0 %v411
  %431 = vmatprep.subr.bf16.mxu0 0
  %432 = vmatpush1.bf16.msra.mxu0 %v410
  %433 = vmatprep.subr.bf16.mxu0 0
  %434 = vmatpush1.bf16.msra.mxu0 %v409
  %435 = vmatprep.subr.bf16.mxu0 0
  %436 = vmatpush1.bf16.msra.mxu0 %v408
  %437 = vmatprep.subr.bf16.mxu0 0
  %438 = vmatpush1.bf16.msra.mxu0 %v407
  %439 = vmatprep.subr.bf16.mxu0 0
  %440 = vmatpush2.bf16.msra.mxu0 0
  %441 = vmatprep.subr.bf16.mxu0 0
  %442 = vmatpush2.bf16.msra.mxu0 0
  %443 = vmatprep.subr.bf16.mxu0 0
  %444 = vmatpush2.bf16.msra.mxu0 0
  %445 = vmatprep.subr.bf16.mxu0 0
  %446 = vmatpush2.bf16.msra.mxu0 0
  %447 = vmatprep.subr.bf16.mxu0 0
  %448 = vmatpush2.bf16.msra.mxu0 0
  %449 = vmatprep.subr.bf16.mxu0 0
  %450 = vmatpush2.bf16.msra.mxu0 0
  %451 = vmatprep.subr.bf16.mxu0 0
  %452 = vmatpush2.bf16.msra.mxu0 0
  %453 = vmatprep.subr.bf16.mxu0 0
  %454 = vmatpush2.bf16.msra.mxu0 0
  %455 = vmatprep.mubr.bf16.mxu0 0
  %456 = vmatmul.mubr.bf16.gmra.mxu0 %v356
  %v457 = vpop.f32.mrf.mxu0
  %v458 = vadd.f32 0.0, %v457
  %v459 = vpop.f32.mrf.mxu0
  %v460 = vpop.f32.mrf.mxu0
  %v461 = vadd.f32 0.0, %v460
  %v462 = vpop.f32.mrf.mxu0
  %463 = vmatprep.mubr.bf16.mxu0 0
  %464 = vmatmul.mubr.bf16.gmra.mxu0 %v357
  %v465 = vpop.f32.mrf.mxu0
  %v466 = vadd.f32 0.0, %v465
  %v467 = vpop.f32.mrf.mxu0
  %v468 = vpop.f32.mrf.mxu0
  %v469 = vadd.f32 0.0, %v468
  %v470 = vpop.f32.mrf.mxu0
  %471 = vdwg.mxu0
  %v472 = vadd.f32 %v342, %v458
  %v473 = vadd.f32 %v345, %v461
  %v474 = vadd.f32 %v350, %v466
  %v475 = vadd.f32 %v353, %v469
  %v477 = vlaneseq
  %v478 = vshrl.u32 %v477, 7
  %v479 = vsub.s32 0, %v478
  %v480 = vrot.slane %v82, %v479
  %v482 = vadd.f32 %v472, %v480
  %v483 = vadd.f32 %v473, %v480
  %v484 = vadd.f32 %v474, %v480
  %v485 = vadd.f32 %v475, %v480
  %s486 = scalar_lea.vmem %s3, 1
  %v487 = vld [vmem:[%s486] sm:$0x1]
  %s488 = scalar_lea.vmem %s3, 2
  %v489 = vld [vmem:[%s488] sm:$0x1]
  %v490 = vadd.f32 %v482, %v483
  %v491 = vadd.f32 %v490, %v484
  %v492 = vadd.f32 %v491, %v485
  %v493 = vrot.slane %v492, 4
  %v494 = vadd.f32 %v492, %v493
  %v495 = vrot.slane %v494, 2
  %v496 = vadd.f32 %v494, %v495
  %v497 = vrot.slane %v496, 1
  %v498 = vadd.f32 %v496, %v497
  %499 = vmatprep.subr.mxu0 0.0
  %500 = vmatpush1.msra.mxu0 %v77
  %501 = vmatprep.subr.mxu0 0.0
  %502 = vmatpush1.msra.mxu0 %v76
  %503 = vmatprep.subr.mxu0 0.0
  %504 = vmatpush1.msra.mxu0 %v75
  %505 = vmatprep.subr.mxu0 0.0
  %506 = vmatpush1.msra.mxu0 %v74
  %507 = vmatprep.subr.mxu0 0.0
  %508 = vmatpush1.msra.mxu0 %v73
  %509 = vmatprep.subr.mxu0 0.0
  %510 = vmatpush1.msra.mxu0 %v72
  %511 = vmatprep.subr.mxu0 0.0
  %512 = vmatpush1.msra.mxu0 %v71
  %513 = vmatprep.subr.mxu0 0.0
  %514 = vmatpush1.msra.mxu0 %v70
  %515 = vmatprep.subr.mxu0 0.0
  %516 = vmatpush1.msra.mxu0 %v69
  %517 = vmatprep.subr.mxu0 0.0
  %518 = vmatpush1.msra.mxu0 %v68
  %519 = vmatprep.subr.mxu0 0.0
  %520 = vmatpush1.msra.mxu0 %v67
  %521 = vmatprep.subr.mxu0 0.0
  %522 = vmatpush1.msra.mxu0 %v66
  %523 = vmatprep.subr.mxu0 0.0
  %524 = vmatpush1.msra.mxu0 %v65
  %525 = vmatprep.subr.mxu0 0.0
  %526 = vmatpush1.msra.mxu0 %v64
  %527 = vmatprep.subr.mxu0 0.0
  %528 = vmatpush1.msra.mxu0 %v63
  %529 = vmatprep.subr.mxu0 0.0
  %530 = vmatpush1.msra.mxu0 %v62
  %531 = vmatprep.subr.mxu0 0.0
  %532 = vmatpush2.msra.mxu0 0.0
  %533 = vmatprep.subr.mxu0 0.0
  %534 = vmatpush2.msra.mxu0 0.0
  %535 = vmatprep.subr.mxu0 0.0
  %536 = vmatpush2.msra.mxu0 0.0
  %537 = vmatprep.subr.mxu0 0.0
  %538 = vmatpush2.msra.mxu0 0.0
  %539 = vmatprep.subr.mxu0 0.0
  %540 = vmatpush2.msra.mxu0 0.0
  %541 = vmatprep.subr.mxu0 0.0
  %542 = vmatpush2.msra.mxu0 0.0
  %543 = vmatprep.subr.mxu0 0.0
  %544 = vmatpush2.msra.mxu0 0.0
  %545 = vmatprep.subr.mxu0 0.0
  %546 = vmatpush2.msra.mxu0 0.0
  %547 = vmatprep.subr.mxu0 0.0
  %548 = vmatpush2.msra.mxu0 0.0
  %549 = vmatprep.subr.mxu0 0.0
  %550 = vmatpush2.msra.mxu0 0.0
  %551 = vmatprep.subr.mxu0 0.0
  %552 = vmatpush2.msra.mxu0 0.0
  %553 = vmatprep.subr.mxu0 0.0
  %554 = vmatpush2.msra.mxu0 0.0
  %555 = vmatprep.subr.mxu0 0.0
  %556 = vmatpush2.msra.mxu0 0.0
  %557 = vmatprep.subr.mxu0 0.0
  %558 = vmatpush2.msra.mxu0 0.0
  %559 = vmatprep.subr.mxu0 0.0
  %560 = vmatpush2.msra.mxu0 0.0
  %561 = vmatprep.subr.mxu0 0.0
  %562 = vmatpush2.msra.mxu0 0.0
  %563 = vmatprep.mubr.f32.mxu0 0.0
  %564 = vmatmul.mubr.f32.gmra.mxu0 %v498
  %v565 = vpop.f32.mrf.mxu0
  %v566 = vadd.f32 0.0, %v565
  %v567 = vpop.f32.mrf.mxu0
  %568 = vdwg.mxu0
  %v569 = vmul.f32 %v566, 0.001953125
  %v570 = vlaneseq
  %v571 = vshrl.u32 %v570, 7
  %v572 = vsub.s32 0, %v571
  %v573 = vrot.slane %v569, %v572
  %v574 = vsub.f32 %v482, %v573
  %v575 = vsub.f32 %v483, %v573
  %v576 = vsub.f32 %v484, %v573
  %v577 = vsub.f32 %v485, %v573
  %v578 = vmul.f32 %v574, %v574
  %v579 = vmul.f32 %v575, %v575
  %v580 = vmul.f32 %v576, %v576
  %v581 = vmul.f32 %v577, %v577
  %v582 = vadd.f32 %v578, %v579
  %v583 = vadd.f32 %v582, %v580
  %v584 = vadd.f32 %v583, %v581
  %v585 = vrot.slane %v584, 4
  %v586 = vadd.f32 %v584, %v585
  %v587 = vrot.slane %v586, 2
  %v588 = vadd.f32 %v586, %v587
  %v589 = vrot.slane %v588, 1
  %v590 = vadd.f32 %v588, %v589
  %591 = vmatprep.subr.mxu0 0.0
  %592 = vmatpush1.msra.mxu0 %v77
  %593 = vmatprep.subr.mxu0 0.0
  %594 = vmatpush1.msra.mxu0 %v76
  %595 = vmatprep.subr.mxu0 0.0
  %596 = vmatpush1.msra.mxu0 %v75
  %597 = vmatprep.subr.mxu0 0.0
  %598 = vmatpush1.msra.mxu0 %v74
  %599 = vmatprep.subr.mxu0 0.0
  %600 = vmatpush1.msra.mxu0 %v73
  %601 = vmatprep.subr.mxu0 0.0
  %602 = vmatpush1.msra.mxu0 %v72
  %603 = vmatprep.subr.mxu0 0.0
  %604 = vmatpush1.msra.mxu0 %v71
  %605 = vmatprep.subr.mxu0 0.0
  %606 = vmatpush1.msra.mxu0 %v70
  %607 = vmatprep.subr.mxu0 0.0
  %608 = vmatpush1.msra.mxu0 %v69
  %609 = vmatprep.subr.mxu0 0.0
  %610 = vmatpush1.msra.mxu0 %v68
  %611 = vmatprep.subr.mxu0 0.0
  %612 = vmatpush1.msra.mxu0 %v67
  %613 = vmatprep.subr.mxu0 0.0
  %614 = vmatpush1.msra.mxu0 %v66
  %615 = vmatprep.subr.mxu0 0.0
  %616 = vmatpush1.msra.mxu0 %v65
  %617 = vmatprep.subr.mxu0 0.0
  %618 = vmatpush1.msra.mxu0 %v64
  %619 = vmatprep.subr.mxu0 0.0
  %620 = vmatpush1.msra.mxu0 %v63
  %621 = vmatprep.subr.mxu0 0.0
  %622 = vmatpush1.msra.mxu0 %v62
  %623 = vmatprep.subr.mxu0 0.0
  %624 = vmatpush2.msra.mxu0 0.0
  %625 = vmatprep.subr.mxu0 0.0
  %626 = vmatpush2.msra.mxu0 0.0
  %627 = vmatprep.subr.mxu0 0.0
  %628 = vmatpush2.msra.mxu0 0.0
  %629 = vmatprep.subr.mxu0 0.0
  %630 = vmatpush2.msra.mxu0 0.0
  %631 = vmatprep.subr.mxu0 0.0
  %632 = vmatpush2.msra.mxu0 0.0
  %633 = vmatprep.subr.mxu0 0.0
  %634 = vmatpush2.msra.mxu0 0.0
  %635 = vmatprep.subr.mxu0 0.0
  %636 = vmatpush2.msra.mxu0 0.0
  %637 = vmatprep.subr.mxu0 0.0
  %638 = vmatpush2.msra.mxu0 0.0
  %639 = vmatprep.subr.mxu0 0.0
  %640 = vmatpush2.msra.mxu0 0.0
  %641 = vmatprep.subr.mxu0 0.0
  %642 = vmatpush2.msra.mxu0 0.0
  %643 = vmatprep.subr.mxu0 0.0
  %644 = vmatpush2.msra.mxu0 0.0
  %645 = vmatprep.subr.mxu0 0.0
  %646 = vmatpush2.msra.mxu0 0.0
  %647 = vmatprep.subr.mxu0 0.0
  %648 = vmatpush2.msra.mxu0 0.0
  %649 = vmatprep.subr.mxu0 0.0
  %650 = vmatpush2.msra.mxu0 0.0
  %651 = vmatprep.subr.mxu0 0.0
  %652 = vmatpush2.msra.mxu0 0.0
  %653 = vmatprep.subr.mxu0 0.0
  %654 = vmatpush2.msra.mxu0 0.0
  %655 = vmatprep.mubr.f32.mxu0 0.0
  %656 = vmatmul.mubr.f32.gmra.mxu0 %v590
  %v657 = vpop.f32.mrf.mxu0
  %v658 = vadd.f32 0.0, %v657
  %v659 = vpop.f32.mrf.mxu0
  %660 = vdwg.mxu0
  %v661 = vmul.f32 %v658, 0.001953125
  %v662 = vadd.f32 %v661, 1e-05
  %v663 = vrsqrt.pop %v662
  %v664 = vmul.f32 %v663, %v487
  %v665 = vlaneseq
  %v666 = vshrl.u32 %v665, 7
  %v667 = vsub.s32 0, %v666
  %v668 = vrot.slane %v664, %v667
  %v669 = vmul.f32 %v574, %v668
  %v670 = vmul.f32 %v575, %v668
  %v671 = vmul.f32 %v576, %v668
  %v672 = vmul.f32 %v577, %v668
  %v674 = vlaneseq
  %v675 = vshrl.u32 %v674, 7
  %v676 = vsub.s32 0, %v675
  %v677 = vrot.slane %v489, %v676
  %v679 = vadd.f32 %v669, %v677
  %v680 = vadd.f32 %v670, %v677
  %v681 = vadd.f32 %v671, %v677
  %v682 = vadd.f32 %v672, %v677
  %v683 = vmax.f32 %v679, 0.0
  %v684 = vmax.f32 %v680, 0.0
  %v685 = vmax.f32 %v681, 0.0
  %v686 = vmax.f32 %v682, 0.0
  %s687 = scalar_lea.vmem %s3, 3
  %v688 = vld [vmem:[%s687] sm:$0x1]
  %v689 = vrot.slane %v683, 7
  %v690 = vrot.slane %v684, 7
  %v691 = vrot.slane %v685, 7
  %v692 = vrot.slane %v686, 7
  %v693 = vsel %vm87, %v691, %v692
  %v694 = vsel %vm87, %v690, %v691
  %v695 = vsel %vm87, %v689, %v690
  %v696 = vsel %vm87, %v692, %v689
  %v697 = vsel %vm96, 0.0, %v696
  %v698 = vsel %vm97, 0.0, %v695
  %v699 = vsel %vm98, 0.0, %v694
  %v700 = vsel %vm99, 0.0, %v693
  %v701 = vrot.slane %v683, 1
  %v702 = vrot.slane %v684, 1
  %v703 = vrot.slane %v685, 1
  %v704 = vrot.slane %v686, 1
  %v705 = vsel %vm108, %v703, %v704
  %v706 = vsel %vm108, %v702, %v703
  %v707 = vsel %vm108, %v701, %v702
  %v708 = vsel %vm108, %v704, %v701
  %v709 = vsel %vm117, 0.0, %v707
  %v710 = vsel %vm118, 0.0, %v706
  %v711 = vsel %vm119, 0.0, %v705
  %v712 = vsel %vm120, 0.0, %v708
  %v713 = vpack.c.bf16 %v698, %v697
  %v714 = vpack.c.bf16 %v700, %v699
  %v715 = vld [vmem:[%s2] sm:$0xf]
  %v716 = vld [vmem:[%s2 + $0x4] sm:$0xf]
  %v717 = vld [vmem:[%s2 + $0x8] sm:$0xf]
  %v718 = vld [vmem:[%s2 + $0xc] sm:$0xf]
  %v719 = vld [vmem:[%s2 + $0x10] sm:$0xf]
  %v720 = vld [vmem:[%s2 + $0x14] sm:$0xf]
  %v721 = vld [vmem:[%s2 + $0x18] sm:$0xf]
  %v722 = vld [vmem:[%s2 + $0x1c] sm:$0xf]
  %v723 = vld [vmem:[%s2 + $0x20] sm:$0xf]
  %v724 = vld [vmem:[%s2 + $0x24] sm:$0xf]
  %v725 = vld [vmem:[%s2 + $0x28] sm:$0xf]
  %v726 = vld [vmem:[%s2 + $0x2c] sm:$0xf]
  %v727 = vld [vmem:[%s2 + $0x30] sm:$0xf]
  %v728 = vld [vmem:[%s2 + $0x34] sm:$0xf]
  %v729 = vld [vmem:[%s2 + $0x38] sm:$0xf]
  %v730 = vld [vmem:[%s2 + $0x3c] sm:$0xf]
  %v731 = vpack.c.bf16 %v684, %v683
  %v732 = vpack.c.bf16 %v686, %v685
  %s733 = scalar_lea.vmem %s2, 64
  %v734 = vld [vmem:[%s733] sm:$0xf]
  %v735 = vld [vmem:[%s733 + $0x4] sm:$0xf]
  %v736 = vld [vmem:[%s733 + $0x8] sm:$0xf]
  %v737 = vld [vmem:[%s733 + $0xc] sm:$0xf]
  %v738 = vld [vmem:[%s733 + $0x10] sm:$0xf]
  %v739 = vld [vmem:[%s733 + $0x14] sm:$0xf]
  %v740 = vld [vmem:[%s733 + $0x18] sm:$0xf]
  %v741 = vld [vmem:[%s733 + $0x1c] sm:$0xf]
  %v742 = vld [vmem:[%s733 + $0x20] sm:$0xf]
  %v743 = vld [vmem:[%s733 + $0x24] sm:$0xf]
  %v744 = vld [vmem:[%s733 + $0x28] sm:$0xf]
  %v745 = vld [vmem:[%s733 + $0x2c] sm:$0xf]
  %v746 = vld [vmem:[%s733 + $0x30] sm:$0xf]
  %v747 = vld [vmem:[%s733 + $0x34] sm:$0xf]
  %v748 = vld [vmem:[%s733 + $0x38] sm:$0xf]
  %v749 = vld [vmem:[%s733 + $0x3c] sm:$0xf]
  %v766 = vunpack.c.l.b16 %v734
  %v767 = vunpack.c.l.b16 %v735
  %v768 = vunpack.c.l.b16 %v736
  %v769 = vunpack.c.l.b16 %v737
  %v770 = vunpack.c.l.b16 %v738
  %v771 = vunpack.c.l.b16 %v739
  %v772 = vunpack.c.l.b16 %v740
  %v773 = vunpack.c.l.b16 %v741
  %v774 = vunpack.c.l.b16 %v742
  %v775 = vunpack.c.l.b16 %v743
  %v776 = vunpack.c.l.b16 %v744
  %v777 = vunpack.c.l.b16 %v745
  %v778 = vunpack.c.l.b16 %v746
  %v779 = vunpack.c.l.b16 %v747
  %v780 = vunpack.c.l.b16 %v748
  %v781 = vunpack.c.l.b16 %v749
  %v782 = vpack.c.b16 %v767, %v766
  %v783 = vpack.c.b16 %v769, %v768
  %v784 = vpack.c.b16 %v771, %v770
  %v785 = vpack.c.b16 %v773, %v772
  %v786 = vpack.c.b16 %v775, %v774
  %v787 = vpack.c.b16 %v777, %v776
  %v788 = vpack.c.b16 %v779, %v778
  %v789 = vpack.c.b16 %v781, %v780
  %798 = vmatprep.subr.bf16.mxu0 0
  %799 = vmatpush1.bf16.msra.mxu0 %v789
  %800 = vmatprep.subr.bf16.mxu0 0
  %801 = vmatpush1.bf16.msra.mxu0 %v788
  %802 = vmatprep.subr.bf16.mxu0 0
  %803 = vmatpush1.bf16.msra.mxu0 %v787
  %804 = vmatprep.subr.bf16.mxu0 0
  %805 = vmatpush1.bf16.msra.mxu0 %v786
  %806 = vmatprep.subr.bf16.mxu0 0
  %807 = vmatpush1.bf16.msra.mxu0 %v785
  %808 = vmatprep.subr.bf16.mxu0 0
  %809 = vmatpush1.bf16.msra.mxu0 %v784
  %810 = vmatprep.subr.bf16.mxu0 0
  %811 = vmatpush1.bf16.msra.mxu0 %v783
  %812 = vmatprep.subr.bf16.mxu0 0
  %813 = vmatpush1.bf16.msra.mxu0 %v782
  %814 = vmatprep.subr.bf16.mxu0 0
  %815 = vmatpush2.bf16.msra.mxu0 0
  %816 = vmatprep.subr.bf16.mxu0 0
  %817 = vmatpush2.bf16.msra.mxu0 0
  %818 = vmatprep.subr.bf16.mxu0 0
  %819 = vmatpush2.bf16.msra.mxu0 0
  %820 = vmatprep.subr.bf16.mxu0 0
  %821 = vmatpush2.bf16.msra.mxu0 0
  %822 = vmatprep.subr.bf16.mxu0 0
  %823 = vmatpush2.bf16.msra.mxu0 0
  %824 = vmatprep.subr.bf16.mxu0 0
  %825 = vmatpush2.bf16.msra.mxu0 0
  %826 = vmatprep.subr.bf16.mxu0 0
  %827 = vmatpush2.bf16.msra.mxu0 0
  %828 = vmatprep.subr.bf16.mxu0 0
  %829 = vmatpush2.bf16.msra.mxu0 0
  %830 = vmatprep.mubr.bf16.mxu0 0
  %831 = vmatmul.mubr.bf16.gmra.mxu0 %v731
  %v832 = vpop.f32.mrf.mxu0
  %v833 = vadd.f32 0.0, %v832
  %v834 = vpop.f32.mrf.mxu0
  %v835 = vpop.f32.mrf.mxu0
  %v836 = vadd.f32 0.0, %v835
  %v837 = vpop.f32.mrf.mxu0
  %838 = vmatprep.mubr.bf16.mxu0 0
  %839 = vmatmul.mubr.bf16.gmra.mxu0 %v732
  %v840 = vpop.f32.mrf.mxu0
  %v841 = vadd.f32 0.0, %v840
  %v842 = vpop.f32.mrf.mxu0
  %v843 = vpop.f32.mrf.mxu0
  %v844 = vadd.f32 0.0, %v843
  %v845 = vpop.f32.mrf.mxu0
  %846 = vdwg.mxu0
  %v863 = vunpack.c.l.b16 %v715
  %v864 = vunpack.c.l.b16 %v716
  %v865 = vunpack.c.l.b16 %v717
  %v866 = vunpack.c.l.b16 %v718
  %v867 = vunpack.c.l.b16 %v719
  %v868 = vunpack.c.l.b16 %v720
  %v869 = vunpack.c.l.b16 %v721
  %v870 = vunpack.c.l.b16 %v722
  %v871 = vunpack.c.l.b16 %v723
  %v872 = vunpack.c.l.b16 %v724
  %v873 = vunpack.c.l.b16 %v725
  %v874 = vunpack.c.l.b16 %v726
  %v875 = vunpack.c.l.b16 %v727
  %v876 = vunpack.c.l.b16 %v728
  %v877 = vunpack.c.l.b16 %v729
  %v878 = vunpack.c.l.b16 %v730
  %v879 = vpack.c.b16 %v864, %v863
  %v880 = vpack.c.b16 %v866, %v865
  %v881 = vpack.c.b16 %v868, %v867
  %v882 = vpack.c.b16 %v870, %v869
  %v883 = vpack.c.b16 %v872, %v871
  %v884 = vpack.c.b16 %v874, %v873
  %v885 = vpack.c.b16 %v876, %v875
  %v886 = vpack.c.b16 %v878, %v877
  %895 = vmatprep.subr.bf16.mxu0 0
  %896 = vmatpush1.bf16.msra.mxu0 %v886
  %897 = vmatprep.subr.bf16.mxu0 0
  %898 = vmatpush1.bf16.msra.mxu0 %v885
  %899 = vmatprep.subr.bf16.mxu0 0
  %900 = vmatpush1.bf16.msra.mxu0 %v884
  %901 = vmatprep.subr.bf16.mxu0 0
  %902 = vmatpush1.bf16.msra.mxu0 %v883
  %903 = vmatprep.subr.bf16.mxu0 0
  %904 = vmatpush1.bf16.msra.mxu0 %v882
  %905 = vmatprep.subr.bf16.mxu0 0
  %906 = vmatpush1.bf16.msra.mxu0 %v881
  %907 = vmatprep.subr.bf16.mxu0 0
  %908 = vmatpush1.bf16.msra.mxu0 %v880
  %909 = vmatprep.subr.bf16.mxu0 0
  %910 = vmatpush1.bf16.msra.mxu0 %v879
  %911 = vmatprep.subr.bf16.mxu0 0
  %912 = vmatpush2.bf16.msra.mxu0 0
  %913 = vmatprep.subr.bf16.mxu0 0
  %914 = vmatpush2.bf16.msra.mxu0 0
  %915 = vmatprep.subr.bf16.mxu0 0
  %916 = vmatpush2.bf16.msra.mxu0 0
  %917 = vmatprep.subr.bf16.mxu0 0
  %918 = vmatpush2.bf16.msra.mxu0 0
  %919 = vmatprep.subr.bf16.mxu0 0
  %920 = vmatpush2.bf16.msra.mxu0 0
  %921 = vmatprep.subr.bf16.mxu0 0
  %922 = vmatpush2.bf16.msra.mxu0 0
  %923 = vmatprep.subr.bf16.mxu0 0
  %924 = vmatpush2.bf16.msra.mxu0 0
  %925 = vmatprep.subr.bf16.mxu0 0
  %926 = vmatpush2.bf16.msra.mxu0 0
  %927 = vmatprep.mubr.bf16.mxu0 0
  %928 = vmatmul.mubr.bf16.gmra.mxu0 %v713
  %v929 = vpop.f32.mrf.mxu0
  %v930 = vadd.f32 %v833, %v929
  %v931 = vpop.f32.mrf.mxu0
  %v932 = vpop.f32.mrf.mxu0
  %v933 = vadd.f32 %v836, %v932
  %v934 = vpop.f32.mrf.mxu0
  %935 = vmatprep.mubr.bf16.mxu0 0
  %936 = vmatmul.mubr.bf16.gmra.mxu0 %v714
  %v937 = vpop.f32.mrf.mxu0
  %v938 = vadd.f32 %v841, %v937
  %v939 = vpop.f32.mrf.mxu0
  %v940 = vpop.f32.mrf.mxu0
  %v941 = vadd.f32 %v844, %v940
  %v942 = vpop.f32.mrf.mxu0
  %943 = vdwg.mxu0
  %v944 = vpack.c.bf16 %v710, %v709
  %v945 = vpack.c.bf16 %v712, %v711
  %s946 = scalar_lea.vmem %s2, 128
  %v947 = vld [vmem:[%s946] sm:$0xf]
  %v948 = vld [vmem:[%s946 + $0x4] sm:$0xf]
  %v949 = vld [vmem:[%s946 + $0x8] sm:$0xf]
  %v950 = vld [vmem:[%s946 + $0xc] sm:$0xf]
  %v951 = vld [vmem:[%s946 + $0x10] sm:$0xf]
  %v952 = vld [vmem:[%s946 + $0x14] sm:$0xf]
  %v953 = vld [vmem:[%s946 + $0x18] sm:$0xf]
  %v954 = vld [vmem:[%s946 + $0x1c] sm:$0xf]
  %v955 = vld [vmem:[%s946 + $0x20] sm:$0xf]
  %v956 = vld [vmem:[%s946 + $0x24] sm:$0xf]
  %v957 = vld [vmem:[%s946 + $0x28] sm:$0xf]
  %v958 = vld [vmem:[%s946 + $0x2c] sm:$0xf]
  %v959 = vld [vmem:[%s946 + $0x30] sm:$0xf]
  %v960 = vld [vmem:[%s946 + $0x34] sm:$0xf]
  %v961 = vld [vmem:[%s946 + $0x38] sm:$0xf]
  %v962 = vld [vmem:[%s946 + $0x3c] sm:$0xf]
  %v979 = vunpack.c.l.b16 %v947
  %v980 = vunpack.c.l.b16 %v948
  %v981 = vunpack.c.l.b16 %v949
  %v982 = vunpack.c.l.b16 %v950
  %v983 = vunpack.c.l.b16 %v951
  %v984 = vunpack.c.l.b16 %v952
  %v985 = vunpack.c.l.b16 %v953
  %v986 = vunpack.c.l.b16 %v954
  %v987 = vunpack.c.l.b16 %v955
  %v988 = vunpack.c.l.b16 %v956
  %v989 = vunpack.c.l.b16 %v957
  %v990 = vunpack.c.l.b16 %v958
  %v991 = vunpack.c.l.b16 %v959
  %v992 = vunpack.c.l.b16 %v960
  %v993 = vunpack.c.l.b16 %v961
  %v994 = vunpack.c.l.b16 %v962
  %v995 = vpack.c.b16 %v980, %v979
  %v996 = vpack.c.b16 %v982, %v981
  %v997 = vpack.c.b16 %v984, %v983
  %v998 = vpack.c.b16 %v986, %v985
  %v999 = vpack.c.b16 %v988, %v987
  %v1000 = vpack.c.b16 %v990, %v989
  %v1001 = vpack.c.b16 %v992, %v991
  %v1002 = vpack.c.b16 %v994, %v993
  %1011 = vmatprep.subr.bf16.mxu0 0
  %1012 = vmatpush1.bf16.msra.mxu0 %v1002
  %1013 = vmatprep.subr.bf16.mxu0 0
  %1014 = vmatpush1.bf16.msra.mxu0 %v1001
  %1015 = vmatprep.subr.bf16.mxu0 0
  %1016 = vmatpush1.bf16.msra.mxu0 %v1000
  %1017 = vmatprep.subr.bf16.mxu0 0
  %1018 = vmatpush1.bf16.msra.mxu0 %v999
  %1019 = vmatprep.subr.bf16.mxu0 0
  %1020 = vmatpush1.bf16.msra.mxu0 %v998
  %1021 = vmatprep.subr.bf16.mxu0 0
  %1022 = vmatpush1.bf16.msra.mxu0 %v997
  %1023 = vmatprep.subr.bf16.mxu0 0
  %1024 = vmatpush1.bf16.msra.mxu0 %v996
  %1025 = vmatprep.subr.bf16.mxu0 0
  %1026 = vmatpush1.bf16.msra.mxu0 %v995
  %1027 = vmatprep.subr.bf16.mxu0 0
  %1028 = vmatpush2.bf16.msra.mxu0 0
  %1029 = vmatprep.subr.bf16.mxu0 0
  %1030 = vmatpush2.bf16.msra.mxu0 0
  %1031 = vmatprep.subr.bf16.mxu0 0
  %1032 = vmatpush2.bf16.msra.mxu0 0
  %1033 = vmatprep.subr.bf16.mxu0 0
  %1034 = vmatpush2.bf16.msra.mxu0 0
  %1035 = vmatprep.subr.bf16.mxu0 0
  %1036 = vmatpush2.bf16.msra.mxu0 0
  %1037 = vmatprep.subr.bf16.mxu0 0
  %1038 = vmatpush2.bf16.msra.mxu0 0
  %1039 = vmatprep.subr.bf16.mxu0 0
  %1040 = vmatpush2.bf16.msra.mxu0 0
  %1041 = vmatprep.subr.bf16.mxu0 0
  %1042 = vmatpush2.bf16.msra.mxu0 0
  %1043 = vmatprep.mubr.bf16.mxu0 0
  %1044 = vmatmul.mubr.bf16.gmra.mxu0 %v944
  %v1045 = vpop.f32.mrf.mxu0
  %v1046 = vadd.f32 0.0, %v1045
  %v1047 = vpop.f32.mrf.mxu0
  %v1048 = vpop.f32.mrf.mxu0
  %v1049 = vadd.f32 0.0, %v1048
  %v1050 = vpop.f32.mrf.mxu0
  %1051 = vmatprep.mubr.bf16.mxu0 0
  %1052 = vmatmul.mubr.bf16.gmra.mxu0 %v945
  %v1053 = vpop.f32.mrf.mxu0
  %v1054 = vadd.f32 0.0, %v1053
  %v1055 = vpop.f32.mrf.mxu0
  %v1056 = vpop.f32.mrf.mxu0
  %v1057 = vadd.f32 0.0, %v1056
  %v1058 = vpop.f32.mrf.mxu0
  %1059 = vdwg.mxu0
  %v1060 = vadd.f32 %v930, %v1046
  %v1061 = vadd.f32 %v933, %v1049
  %v1062 = vadd.f32 %v938, %v1054
  %v1063 = vadd.f32 %v941, %v1057
  %v1065 = vlaneseq
  %v1066 = vshrl.u32 %v1065, 7
  %v1067 = vsub.s32 0, %v1066
  %v1068 = vrot.slane %v688, %v1067
  %v1070 = vadd.f32 %v1060, %v1068
  %v1071 = vadd.f32 %v1061, %v1068
  %v1072 = vadd.f32 %v1062, %v1068
  %v1073 = vadd.f32 %v1063, %v1068
  %s1074 = scalar_lea.vmem %s3, 4
  %v1075 = vld [vmem:[%s1074] sm:$0x1]
  %s1076 = scalar_lea.vmem %s3, 5
  %v1077 = vld [vmem:[%s1076] sm:$0x1]
  %v1078 = vadd.f32 %v1070, %v1071
  %v1079 = vadd.f32 %v1078, %v1072
  %v1080 = vadd.f32 %v1079, %v1073
  %v1081 = vrot.slane %v1080, 4
  %v1082 = vadd.f32 %v1080, %v1081
  %v1083 = vrot.slane %v1082, 2
  %v1084 = vadd.f32 %v1082, %v1083
  %v1085 = vrot.slane %v1084, 1
  %v1086 = vadd.f32 %v1084, %v1085
  %1087 = vmatprep.subr.mxu0 0.0
  %1088 = vmatpush1.msra.mxu0 %v77
  %1089 = vmatprep.subr.mxu0 0.0
  %1090 = vmatpush1.msra.mxu0 %v76
  %1091 = vmatprep.subr.mxu0 0.0
  %1092 = vmatpush1.msra.mxu0 %v75
  %1093 = vmatprep.subr.mxu0 0.0
  %1094 = vmatpush1.msra.mxu0 %v74
  %1095 = vmatprep.subr.mxu0 0.0
  %1096 = vmatpush1.msra.mxu0 %v73
  %1097 = vmatprep.subr.mxu0 0.0
  %1098 = vmatpush1.msra.mxu0 %v72
  %1099 = vmatprep.subr.mxu0 0.0
  %1100 = vmatpush1.msra.mxu0 %v71
  %1101 = vmatprep.subr.mxu0 0.0
  %1102 = vmatpush1.msra.mxu0 %v70
  %1103 = vmatprep.subr.mxu0 0.0
  %1104 = vmatpush1.msra.mxu0 %v69
  %1105 = vmatprep.subr.mxu0 0.0
  %1106 = vmatpush1.msra.mxu0 %v68
  %1107 = vmatprep.subr.mxu0 0.0
  %1108 = vmatpush1.msra.mxu0 %v67
  %1109 = vmatprep.subr.mxu0 0.0
  %1110 = vmatpush1.msra.mxu0 %v66
  %1111 = vmatprep.subr.mxu0 0.0
  %1112 = vmatpush1.msra.mxu0 %v65
  %1113 = vmatprep.subr.mxu0 0.0
  %1114 = vmatpush1.msra.mxu0 %v64
  %1115 = vmatprep.subr.mxu0 0.0
  %1116 = vmatpush1.msra.mxu0 %v63
  %1117 = vmatprep.subr.mxu0 0.0
  %1118 = vmatpush1.msra.mxu0 %v62
  %1119 = vmatprep.subr.mxu0 0.0
  %1120 = vmatpush2.msra.mxu0 0.0
  %1121 = vmatprep.subr.mxu0 0.0
  %1122 = vmatpush2.msra.mxu0 0.0
  %1123 = vmatprep.subr.mxu0 0.0
  %1124 = vmatpush2.msra.mxu0 0.0
  %1125 = vmatprep.subr.mxu0 0.0
  %1126 = vmatpush2.msra.mxu0 0.0
  %1127 = vmatprep.subr.mxu0 0.0
  %1128 = vmatpush2.msra.mxu0 0.0
  %1129 = vmatprep.subr.mxu0 0.0
  %1130 = vmatpush2.msra.mxu0 0.0
  %1131 = vmatprep.subr.mxu0 0.0
  %1132 = vmatpush2.msra.mxu0 0.0
  %1133 = vmatprep.subr.mxu0 0.0
  %1134 = vmatpush2.msra.mxu0 0.0
  %1135 = vmatprep.subr.mxu0 0.0
  %1136 = vmatpush2.msra.mxu0 0.0
  %1137 = vmatprep.subr.mxu0 0.0
  %1138 = vmatpush2.msra.mxu0 0.0
  %1139 = vmatprep.subr.mxu0 0.0
  %1140 = vmatpush2.msra.mxu0 0.0
  %1141 = vmatprep.subr.mxu0 0.0
  %1142 = vmatpush2.msra.mxu0 0.0
  %1143 = vmatprep.subr.mxu0 0.0
  %1144 = vmatpush2.msra.mxu0 0.0
  %1145 = vmatprep.subr.mxu0 0.0
  %1146 = vmatpush2.msra.mxu0 0.0
  %1147 = vmatprep.subr.mxu0 0.0
  %1148 = vmatpush2.msra.mxu0 0.0
  %1149 = vmatprep.subr.mxu0 0.0
  %1150 = vmatpush2.msra.mxu0 0.0
  %1151 = vmatprep.mubr.f32.mxu0 0.0
  %1152 = vmatmul.mubr.f32.gmra.mxu0 %v1086
  %v1153 = vpop.f32.mrf.mxu0
  %v1154 = vadd.f32 0.0, %v1153
  %v1155 = vpop.f32.mrf.mxu0
  %1156 = vdwg.mxu0
  %v1157 = vmul.f32 %v1154, 0.001953125
  %v1158 = vlaneseq
  %v1159 = vshrl.u32 %v1158, 7
  %v1160 = vsub.s32 0, %v1159
  %v1161 = vrot.slane %v1157, %v1160
  %v1162 = vsub.f32 %v1070, %v1161
  %v1163 = vsub.f32 %v1071, %v1161
  %v1164 = vsub.f32 %v1072, %v1161
  %v1165 = vsub.f32 %v1073, %v1161
  %v1166 = vmul.f32 %v1162, %v1162
  %v1167 = vmul.f32 %v1163, %v1163
  %v1168 = vmul.f32 %v1164, %v1164
  %v1169 = vmul.f32 %v1165, %v1165
  %v1170 = vadd.f32 %v1166, %v1167
  %v1171 = vadd.f32 %v1170, %v1168
  %v1172 = vadd.f32 %v1171, %v1169
  %v1173 = vrot.slane %v1172, 4
  %v1174 = vadd.f32 %v1172, %v1173
  %v1175 = vrot.slane %v1174, 2
  %v1176 = vadd.f32 %v1174, %v1175
  %v1177 = vrot.slane %v1176, 1
  %v1178 = vadd.f32 %v1176, %v1177
  %1179 = vmatprep.subr.mxu0 0.0
  %1180 = vmatpush1.msra.mxu0 %v77
  %1181 = vmatprep.subr.mxu0 0.0
  %1182 = vmatpush1.msra.mxu0 %v76
  %1183 = vmatprep.subr.mxu0 0.0
  %1184 = vmatpush1.msra.mxu0 %v75
  %1185 = vmatprep.subr.mxu0 0.0
  %1186 = vmatpush1.msra.mxu0 %v74
  %1187 = vmatprep.subr.mxu0 0.0
  %1188 = vmatpush1.msra.mxu0 %v73
  %1189 = vmatprep.subr.mxu0 0.0
  %1190 = vmatpush1.msra.mxu0 %v72
  %1191 = vmatprep.subr.mxu0 0.0
  %1192 = vmatpush1.msra.mxu0 %v71
  %1193 = vmatprep.subr.mxu0 0.0
  %1194 = vmatpush1.msra.mxu0 %v70
  %1195 = vmatprep.subr.mxu0 0.0
  %1196 = vmatpush1.msra.mxu0 %v69
  %1197 = vmatprep.subr.mxu0 0.0
  %1198 = vmatpush1.msra.mxu0 %v68
  %1199 = vmatprep.subr.mxu0 0.0
  %1200 = vmatpush1.msra.mxu0 %v67
  %1201 = vmatprep.subr.mxu0 0.0
  %1202 = vmatpush1.msra.mxu0 %v66
  %1203 = vmatprep.subr.mxu0 0.0
  %1204 = vmatpush1.msra.mxu0 %v65
  %1205 = vmatprep.subr.mxu0 0.0
  %1206 = vmatpush1.msra.mxu0 %v64
  %1207 = vmatprep.subr.mxu0 0.0
  %1208 = vmatpush1.msra.mxu0 %v63
  %1209 = vmatprep.subr.mxu0 0.0
  %1210 = vmatpush1.msra.mxu0 %v62
  %1211 = vmatprep.subr.mxu0 0.0
  %1212 = vmatpush2.msra.mxu0 0.0
  %1213 = vmatprep.subr.mxu0 0.0
  %1214 = vmatpush2.msra.mxu0 0.0
  %1215 = vmatprep.subr.mxu0 0.0
  %1216 = vmatpush2.msra.mxu0 0.0
  %1217 = vmatprep.subr.mxu0 0.0
  %1218 = vmatpush2.msra.mxu0 0.0
  %1219 = vmatprep.subr.mxu0 0.0
  %1220 = vmatpush2.msra.mxu0 0.0
  %1221 = vmatprep.subr.mxu0 0.0
  %1222 = vmatpush2.msra.mxu0 0.0
  %1223 = vmatprep.subr.mxu0 0.0
  %1224 = vmatpush2.msra.mxu0 0.0
  %1225 = vmatprep.subr.mxu0 0.0
  %1226 = vmatpush2.msra.mxu0 0.0
  %1227 = vmatprep.subr.mxu0 0.0
  %1228 = vmatpush2.msra.mxu0 0.0
  %1229 = vmatprep.subr.mxu0 0.0
  %1230 = vmatpush2.msra.mxu0 0.0
  %1231 = vmatprep.subr.mxu0 0.0
  %1232 = vmatpush2.msra.mxu0 0.0
  %1233 = vmatprep.subr.mxu0 0.0
  %1234 = vmatpush2.msra.mxu0 0.0
  %1235 = vmatprep.subr.mxu0 0.0
  %1236 = vmatpush2.msra.mxu0 0.0
  %1237 = vmatprep.subr.mxu0 0.0
  %1238 = vmatpush2.msra.mxu0 0.0
  %1239 = vmatprep.subr.mxu0 0.0
  %1240 = vmatpush2.msra.mxu0 0.0
  %1241 = vmatprep.subr.mxu0 0.0
  %1242 = vmatpush2.msra.mxu0 0.0
  %1243 = vmatprep.mubr.f32.mxu0 0.0
  %1244 = vmatmul.mubr.f32.gmra.mxu0 %v1178
  %v1245 = vpop.f32.mrf.mxu0
  %v1246 = vadd.f32 0.0, %v1245
  %v1247 = vpop.f32.mrf.mxu0
  %1248 = vdwg.mxu0
  %v1249 = vmul.f32 %v1246, 0.001953125
  %v1250 = vadd.f32 %v1249, 1e-05
  %v1251 = vrsqrt.pop %v1250
  %v1252 = vmul.f32 %v1251, %v1075
  %v1253 = vlaneseq
  %v1254 = vshrl.u32 %v1253, 7
  %v1255 = vsub.s32 0, %v1254
  %v1256 = vrot.slane %v1252, %v1255
  %v1257 = vmul.f32 %v1162, %v1256
  %v1258 = vmul.f32 %v1163, %v1256
  %v1259 = vmul.f32 %v1164, %v1256
  %v1260 = vmul.f32 %v1165, %v1256
  %v1262 = vlaneseq
  %v1263 = vshrl.u32 %v1262, 7
  %v1264 = vsub.s32 0, %v1263
  %v1265 = vrot.slane %v1077, %v1264
  %v1267 = vadd.f32 %v1257, %v1265
  %v1268 = vadd.f32 %v1258, %v1265
  %v1269 = vadd.f32 %v1259, %v1265
  %v1270 = vadd.f32 %v1260, %v1265
  %v1271 = vmax.f32 %v1267, 0.0
  %v1272 = vmax.f32 %v1268, 0.0
  %v1273 = vmax.f32 %v1269, 0.0
  %v1274 = vmax.f32 %v1270, 0.0
  %1275 = vst [vmem:[%s5] sm:$0xff] %v1271
  %1276 = vst [vmem:[%s5 + $0x8] sm:$0xff] %v1272
  %1277 = vst [vmem:[%s5 + $0x10] sm:$0xff] %v1273
  %1278 = vst [vmem:[%s5 + $0x18] sm:$0xff] %v1274
  // Predicated region
  $region22: #{conv_block_forward.1} parent=0 // pred_check
    _
  $region23: #{conv_block_forward.1} parent=0 // pred_check_branch
    %1280 = sbr.rel (0) target = $region25
  $region24: #{conv_block_forward.1} parent=0 // pred_region
    _
  $region25: #{conv_block_forward.1} parent=0 // pred_fallthru
    _
  // Predicated region
  $region26: #{conv_block_forward.1} parent=0 // pred_check
    _
  $region27: #{conv_block_forward.1} parent=0 // pred_check_branch
    %1282 = sbr.rel (0) target = $region29
  $region28: #{conv_block_forward.1} parent=0 // pred_region
    _
  $region29: #{conv_block_forward.1} parent=0 // pred_fallthru
    _

</llo_original>
